<compile_context>
chip_gen: v6e
topology: v6e:2x2x1
jax: 0.10.0
libtpu: 0.0.40
codegen_flags: <defaults>
</compile_context>

<pallas_src>
import functools

import jax
import jax.numpy as jnp
from jax.experimental import pallas as pl
from jax.experimental.pallas import tpu as pltpu

LANE = 128  # TPU lane width; channel dims are padded up to a multiple of this.


def _round_up(x, m):
    return (x + m - 1) // m * m


# ----------------------------------------------------------------------------
# Fused kernel: conv1(1x1)+bn1+relu -> conv2(3x3,pad1)+bn2+relu
#               -> conv3(1x1)+bn3 + residual + relu
# One grid step == one image; all intermediates stay in VMEM.
# ----------------------------------------------------------------------------
def _bottleneck_kernel(x_ref, w1_ref, b1_ref, w2_ref, b2_ref, w3_ref, b3_ref,
                       o_ref, a1pad_ref, *, H, W, P, C):
    # x_ref / o_ref: (H*W, C) — one image's pixels as rows, channels on lanes.
    x2d = x_ref[...]                                        # bf16 (H*W, C)

    # ---- conv1 (1x1) + bn1 (scale folded into w1) + relu --------------------
    a1 = jnp.dot(x2d, w1_ref[...], preferred_element_type=jnp.float32)
    a1 = jnp.maximum(a1 + b1_ref[...], 0.0)                 # f32 (H*W, P)

    # Stage conv1 output into a spatially zero-padded VMEM scratch so the 3x3
    # conv can be expressed as 9 shifted matmuls (no HBM im2col round trip).
    # Zero every step: with a "parallel" grid each core has its own scratch.
    a1pad_ref[...] = jnp.zeros_like(a1pad_ref)
    a1pad_ref[1:H + 1, 1:W + 1, :] = a1.reshape(H, W, P)

    # ---- conv2 (3x3, pad=1) + bn2 (scale folded into w2) + relu -------------
    acc = jnp.zeros((H * W, P), jnp.float32)
    for dy in range(3):
        for dx in range(3):
            k = dy * 3 + dx
            lhs = a1pad_ref[dy:dy + H, dx:dx + W, :].astype(jnp.bfloat16)
            acc = acc + jnp.dot(lhs.reshape(H * W, P),
                                w2_ref[k * P:(k + 1) * P, :],
                                preferred_element_type=jnp.float32)
    a2 = jnp.maximum(acc + b2_ref[...], 0.0).astype(jnp.bfloat16)

    # ---- conv3 (1x1) + bn3 (scale folded into w3) + residual + relu ---------
    y = jnp.dot(a2, w3_ref[...], preferred_element_type=jnp.float32)
    y = y + b3_ref[...] + x2d.astype(jnp.float32)
    o_ref[...] = jnp.maximum(y, 0.0).astype(o_ref.dtype)


# ----------------------------------------------------------------------------
# Hoisted parameter preparation (done ONCE, outside the forward hot path):
# fold BN scale into weight columns, transpose to matmul layout, pad channels
# to lane multiples, cast weights to bf16.
# ----------------------------------------------------------------------------
def fold_bn(gamma, beta, running_mean, running_var, eps=1e-5):
    scale = gamma / jnp.sqrt(running_var + eps)
    bias = beta - running_mean * scale
    return scale.astype(jnp.float32), bias.astype(jnp.float32)


def prepare_params(params, eps=1e-5):
    planes, inplanes = params["w1"].shape[0], params["w1"].shape[1]
    assert inplanes == 4 * planes, (
        "no-downsample Bottleneck requires inplanes == 4*planes")
    c4 = 4 * planes
    P = _round_up(planes, LANE)
    C = _round_up(c4, LANE)

    s1, b1 = fold_bn(*params["bn1"], eps=eps)
    s2, b2 = fold_bn(*params["bn2"], eps=eps)
    s3, b3 = fold_bn(*params["bn3"], eps=eps)

    # conv1 1x1: (planes, inplanes, 1, 1) -> (inplanes, planes), scale folded.
    w1 = params["w1"].reshape(planes, inplanes).T * s1[None, :]
    w1p = jnp.zeros((C, P), jnp.float32).at[:inplanes, :planes].set(w1)

    # conv2 3x3: (out, in, kh, kw) -> (kh, kw, in, out), scale folded, -> (9*P, P).
    w2 = jnp.transpose(params["w2"], (2, 3, 1, 0)) * s2[None, None, None, :]
    w2p = jnp.zeros((3, 3, P, P), jnp.float32).at[:, :, :planes, :planes].set(w2)
    w2p = w2p.reshape(9 * P, P)

    # conv3 1x1: (4*planes, planes, 1, 1) -> (planes, 4*planes), scale folded.
    w3 = params["w3"].reshape(c4, planes).T * s3[None, :]
    w3p = jnp.zeros((P, C), jnp.float32).at[:planes, :c4].set(w3)

    b1p = jnp.zeros((1, P), jnp.float32).at[0, :planes].set(b1)
    b2p = jnp.zeros((1, P), jnp.float32).at[0, :planes].set(b2)
    b3p = jnp.zeros((1, C), jnp.float32).at[0, :c4].set(b3)

    return dict(
        w1=w1p.astype(jnp.bfloat16), b1=b1p,
        w2=w2p.astype(jnp.bfloat16), b2=b2p,
        w3=w3p.astype(jnp.bfloat16), b3=b3p,
        planes=planes, inplanes=inplanes, P=P, C=C,
    )


def _vmem_limit_bytes(h, w, P, C):
    """Rough per-step VMEM estimate with headroom; capped for v7x (64 MiB phys)."""
    bf, f4 = 2, 4
    est = (
        2 * h * w * C * bf                       # double-buffered input block
        + 2 * h * w * C * f4                     # double-buffered output block
        + 2 * (C * P + 9 * P * P + P * C) * bf   # double-buffered weights
        + (h + 2) * (w + 2) * P * f4             # padded conv1 scratch
        + h * w * (3 * P + 2 * C) * f4           # live f32 temporaries (rough)
    )
    return int(min(64 * 1024 * 1024, max(32 * 1024 * 1024, 2 * est)))


# ----------------------------------------------------------------------------
# Forward wrapper. Public API is PyTorch-style NCHW float32.
# ----------------------------------------------------------------------------
def bottleneck_forward(x_nchw, prepped, stride=1):
    # TODO(synk): stride != 1 / downsample path not implemented (residual add
    # is only shape-consistent without it); training-mode batch-stats BN not
    # implemented (eval-mode running stats are folded into the weights).
    assert stride == 1, "only stride=1 / downsample=None is supported"
    n, cin, h, w = x_nchw.shape
    assert cin == prepped["inplanes"], (cin, prepped["inplanes"])
    assert (h * w) % 8 == 0, "H*W must be a multiple of 8 (sublane granularity)"
    P, C = prepped["P"], prepped["C"]
    hw = h * w

    # Boundary layout work (one fused XLA pass): NCHW -> NHWC, pad channels to
    # a lane multiple, flatten pixels to rows, cast to bf16.  Callers that can
    # supply NHWC/bf16 directly should skip this.
    x = jnp.transpose(x_nchw, (0, 2, 3, 1))
    x = jnp.pad(x, ((0, 0), (0, 0), (0, 0), (0, C - cin)))
    x2d = x.reshape(n * hw, C).astype(jnp.bfloat16)

    kern = functools.partial(_bottleneck_kernel, H=h, W=w, P=P, C=C)
    out2d = pl.pallas_call(
        kern,
        out_shape=jax.ShapeDtypeStruct((n * hw, C), jnp.float32),
        grid_spec=pltpu.PrefetchScalarGridSpec(
            num_scalar_prefetch=0,
            grid=(n,),                      # >= 2 steps -> both v7x TCs get work
            in_specs=[
                pl.BlockSpec((hw, C), lambda b: (b, 0)),
                pl.BlockSpec((C, P), lambda b: (0, 0)),
                pl.BlockSpec((1, P), lambda b: (0, 0)),
                pl.BlockSpec((9 * P, P), lambda b: (0, 0)),
                pl.BlockSpec((1, P), lambda b: (0, 0)),
                pl.BlockSpec((P, C), lambda b: (0, 0)),
                pl.BlockSpec((1, C), lambda b: (0, 0)),
            ],
            out_specs=pl.BlockSpec((hw, C), lambda b: (b, 0)),
            scratch_shapes=[pltpu.VMEM((h + 2, w + 2, P), jnp.float32)],
        ),
        compiler_params=pltpu.CompilerParams(
            dimension_semantics=("parallel",),
            vmem_limit_bytes=_vmem_limit_bytes(h, w, P, C),
        ),
    )(x2d, prepped["w1"], prepped["b1"], prepped["w2"], prepped["b2"],
      prepped["w3"], prepped["b3"])

    out = out2d.reshape(n, h, w, C)[:, :, :, :cin]   # drop channel padding
    return jnp.transpose(out, (0, 3, 1, 2))          # back to NCHW


# ----------------------------------------------------------------------------
# Pure-JAX reference performing the same (bf16-compute / f32-accumulate) math.
# ----------------------------------------------------------------------------
def bottleneck_ref(x_nchw, prepped, stride=1):
    assert stride == 1
    n, cin, h, w = x_nchw.shape
    P, C = prepped["P"], prepped["C"]
    x = jnp.transpose(x_nchw, (0, 2, 3, 1))
    x = jnp.pad(x, ((0, 0), (0, 0), (0, 0), (0, C - cin)))
    x2d = x.reshape(n * h * w, C).astype(jnp.bfloat16)

    a1 = jnp.dot(x2d, prepped["w1"], preferred_element_type=jnp.float32)
    a1 = jnp.maximum(a1 + prepped["b1"], 0.0).astype(jnp.bfloat16)
    a1p = jnp.pad(a1.reshape(n, h, w, P), ((0, 0), (1, 1), (1, 1), (0, 0)))

    acc = jnp.zeros((n * h * w, P), jnp.float32)
    for dy in range(3):
        for dx in range(3):
            k = dy * 3 + dx
            lhs = a1p[:, dy:dy + h, dx:dx + w, :].reshape(n * h * w, P)
            acc = acc + jnp.dot(lhs, prepped["w2"][k * P:(k + 1) * P, :],
                                preferred_element_type=jnp.float32)
    a2 = jnp.maximum(acc + prepped["b2"], 0.0).astype(jnp.bfloat16)

    y = jnp.dot(a2, prepped["w3"], preferred_element_type=jnp.float32)
    y = jnp.maximum(y + prepped["b3"] + x2d.astype(jnp.float32), 0.0)
    y = y.reshape(n, h, w, C)[:, :, :, :cin]
    return jnp.transpose(y, (0, 3, 1, 2))


# ----------------------------------------------------------------------------
def make_params(key, inplanes, planes):
    ks = jax.random.split(key, 16)

    def bn_params(k, c):
        k0, k1, k2, k3 = jax.random.split(k, 4)
        gamma = 0.5 + jax.random.uniform(k0, (c,), jnp.float32)   # > 0
        beta = 0.1 * jax.random.normal(k1, (c,), jnp.float32)
        rmean = 0.1 * jax.random.normal(k2, (c,), jnp.float32)
        rvar = 0.5 + jax.random.uniform(k3, (c,), jnp.float32)    # > 0
        return (gamma, beta, rmean, rvar)

    c4 = 4 * planes
    return {
        "w1": 0.1 * jax.random.normal(ks[0], (planes, inplanes, 1, 1), jnp.float32),
        "bn1": bn_params(ks[1], planes),
        "w2": 0.1 * jax.random.normal(ks[2], (planes, planes, 3, 3), jnp.float32),
        "bn2": bn_params(ks[3], planes),
        "w3": 0.1 * jax.random.normal(ks[4], (c4, planes, 1, 1), jnp.float32),
        "bn3": bn_params(ks[5], c4),
    }


if __name__ == "__main__":
    key = jax.random.PRNGKey(0)
    kx, kp = jax.random.split(key)

    planes = 8
    inplanes = 4 * planes        # residual add requires inplanes == 4*planes
    n, h, w = 2, 8, 8
    stride = 1

    x = jax.random.normal(kx, (n, inplanes, h, w), jnp.float32)   # NCHW input
    params = make_params(kp, inplanes, planes)
    prepped = prepare_params(params)          # hoisted: folded/padded/bf16 once

    fwd = jax.jit(lambda inp: bottleneck_forward(inp, prepped, stride=stride))
    out = jax.block_until_ready(fwd(x))

    ref = jax.block_until_ready(bottleneck_ref(x, prepped, stride=stride))
    assert out.shape == (n, 4 * planes, h, w), out.shape
    max_err = float(jnp.max(jnp.abs(out - ref)))
    assert jnp.allclose(out, ref, atol=1e-2, rtol=1e-2), max_err

    print("KERNEL_OK")
</pallas_src>

<mosaic_0001>
module attributes {stable_mosaic.version = 11 : i64} {
  func.func @_bottleneck_kernel(%arg0: i32, %arg1: memref<64x128xbf16, #tpu.memory_space<vmem>>, %arg2: memref<128x128xbf16, #tpu.memory_space<vmem>>, %arg3: memref<1x128xf32, #tpu.memory_space<vmem>>, %arg4: memref<1152x128xbf16, #tpu.memory_space<vmem>>, %arg5: memref<1x128xf32, #tpu.memory_space<vmem>>, %arg6: memref<128x128xbf16, #tpu.memory_space<vmem>>, %arg7: memref<1x128xf32, #tpu.memory_space<vmem>>, %arg8: memref<64x128xf32, #tpu.memory_space<vmem>>, %arg9: memref<10x10x128xf32, #tpu.memory_space<vmem>>) attributes {dimension_semantics = [#tpu.dimension_semantics<parallel>], iteration_bounds = array<i64: 2>, scalar_prefetch = 0 : i64, scratch_operands = 1 : i64, tpu.core_type = #tpu.core_type<tc>, window_params = [{transform_indices = @transform_0, window_bounds = array<i64: 64, 128>}, {pipeline_mode = #tpu.pipeline_mode<synchronous>, transform_indices = @transform_1, window_bounds = array<i64: 128, 128>}, {pipeline_mode = #tpu.pipeline_mode<synchronous>, transform_indices = @transform_2, window_bounds = array<i64: 1, 128>}, {pipeline_mode = #tpu.pipeline_mode<synchronous>, transform_indices = @transform_3, window_bounds = array<i64: 1152, 128>}, {pipeline_mode = #tpu.pipeline_mode<synchronous>, transform_indices = @transform_4, window_bounds = array<i64: 1, 128>}, {pipeline_mode = #tpu.pipeline_mode<synchronous>, transform_indices = @transform_5, window_bounds = array<i64: 128, 128>}, {pipeline_mode = #tpu.pipeline_mode<synchronous>, transform_indices = @transform_6, window_bounds = array<i64: 1, 128>}, {transform_indices = @transform_7, window_bounds = array<i64: 64, 128>}]} {
    %c0 = arith.constant 0 : index
    %c0_0 = arith.constant 0 : index
    %0 = vector.load %arg1[%c0, %c0_0] : memref<64x128xbf16, #tpu.memory_space<vmem>>, vector<64x128xbf16>
    %c0_1 = arith.constant 0 : index
    %c0_2 = arith.constant 0 : index
    %1 = vector.load %arg2[%c0_1, %c0_2] : memref<128x128xbf16, #tpu.memory_space<vmem>>, vector<128x128xbf16>
    %cst = arith.constant dense<0.000000e+00> : vector<64x128xf32>
    %2 = tpu.matmul %0, %1, %cst {dimension_numbers = #tpu.dot_dimension_numbers<[1], [0], [0], [1], [0, 0, 1, 1], [], []>} : vector<64x128xbf16>, vector<128x128xbf16>, vector<64x128xf32> -> vector<64x128xf32>
    %c0_3 = arith.constant 0 : index
    %c0_4 = arith.constant 0 : index
    %3 = vector.load %arg3[%c0_3, %c0_4] : memref<1x128xf32, #tpu.memory_space<vmem>>, vector<1x128xf32>
    %4 = vector.broadcast %3 : vector<1x128xf32> to vector<64x128xf32>
    %5 = arith.addf %2, %4 : vector<64x128xf32>
    %cst_5 = arith.constant 0.000000e+00 : f32
    %6 = vector.broadcast %cst_5 : f32 to vector<64x128xf32>
    %7 = arith.maximumf %5, %6 : vector<64x128xf32>
    %cst_6 = arith.constant 0.000000e+00 : f32
    %8 = vector.broadcast %cst_6 : f32 to vector<10x10x128xf32>
    %c0_7 = arith.constant 0 : index
    %c0_8 = arith.constant 0 : index
    %c0_9 = arith.constant 0 : index
    %9 = vector.load %arg9[%c0_7, %c0_8, %c0_9] : memref<10x10x128xf32, #tpu.memory_space<vmem>>, vector<10x10x128xf32>
    tpu.vector_store %arg9[%c0_7, %c0_8, %c0_9], %8 {strides = array<i32>} : memref<10x10x128xf32, #tpu.memory_space<vmem>>, vector<10x10x128xf32>,
    %10 = vector.shape_cast %7 : vector<64x128xf32> to vector<8x8x128xf32>
    %c1 = arith.constant 1 : index
    %c1_10 = arith.constant 1 : index
    %c0_11 = arith.constant 0 : index
    %11 = vector.load %arg9[%c1, %c1_10, %c0_11] : memref<10x10x128xf32, #tpu.memory_space<vmem>>, vector<8x8x128xf32>
    tpu.vector_store %arg9[%c1, %c1_10, %c0_11], %10 {strides = array<i32>} : memref<10x10x128xf32, #tpu.memory_space<vmem>>, vector<8x8x128xf32>,
    %cst_12 = arith.constant 0.000000e+00 : f32
    %12 = vector.broadcast %cst_12 : f32 to vector<64x128xf32>
    %c0_13 = arith.constant 0 : index
    %c0_14 = arith.constant 0 : index
    %c0_15 = arith.constant 0 : index
    %13 = vector.load %arg9[%c0_13, %c0_14, %c0_15] : memref<10x10x128xf32, #tpu.memory_space<vmem>>, vector<8x8x128xf32>
    %14 = arith.truncf %13 : vector<8x8x128xf32> to vector<8x8x128xbf16>
    %15 = vector.shape_cast %14 : vector<8x8x128xbf16> to vector<64x128xbf16>
    %c0_16 = arith.constant 0 : index
    %c0_17 = arith.constant 0 : index
    %16 = vector.load %arg4[%c0_16, %c0_17] : memref<1152x128xbf16, #tpu.memory_space<vmem>>, vector<128x128xbf16>
    %cst_18 = arith.constant dense<0.000000e+00> : vector<64x128xf32>
    %17 = tpu.matmul %15, %16, %cst_18 {dimension_numbers = #tpu.dot_dimension_numbers<[1], [0], [0], [1], [0, 0, 1, 1], [], []>} : vector<64x128xbf16>, vector<128x128xbf16>, vector<64x128xf32> -> vector<64x128xf32>
    %18 = arith.addf %12, %17 : vector<64x128xf32>
    %c0_19 = arith.constant 0 : index
    %c1_20 = arith.constant 1 : index
    %c0_21 = arith.constant 0 : index
    %19 = vector.load %arg9[%c0_19, %c1_20, %c0_21] : memref<10x10x128xf32, #tpu.memory_space<vmem>>, vector<8x8x128xf32>
    %20 = arith.truncf %19 : vector<8x8x128xf32> to vector<8x8x128xbf16>
    %21 = vector.shape_cast %20 : vector<8x8x128xbf16> to vector<64x128xbf16>
    %c128 = arith.constant 128 : index
    %c0_22 = arith.constant 0 : index
    %22 = vector.load %arg4[%c128, %c0_22] : memref<1152x128xbf16, #tpu.memory_space<vmem>>, vector<128x128xbf16>
    %cst_23 = arith.constant dense<0.000000e+00> : vector<64x128xf32>
    %23 = tpu.matmul %21, %22, %cst_23 {dimension_numbers = #tpu.dot_dimension_numbers<[1], [0], [0], [1], [0, 0, 1, 1], [], []>} : vector<64x128xbf16>, vector<128x128xbf16>, vector<64x128xf32> -> vector<64x128xf32>
    %24 = arith.addf %18, %23 : vector<64x128xf32>
    %c0_24 = arith.constant 0 : index
    %c2 = arith.constant 2 : index
    %c0_25 = arith.constant 0 : index
    %25 = vector.load %arg9[%c0_24, %c2, %c0_25] : memref<10x10x128xf32, #tpu.memory_space<vmem>>, vector<8x8x128xf32>
    %26 = arith.truncf %25 : vector<8x8x128xf32> to vector<8x8x128xbf16>
    %27 = vector.shape_cast %26 : vector<8x8x128xbf16> to vector<64x128xbf16>
    %c256 = arith.constant 256 : index
    %c0_26 = arith.constant 0 : index
    %28 = vector.load %arg4[%c256, %c0_26] : memref<1152x128xbf16, #tpu.memory_space<vmem>>, vector<128x128xbf16>
    %cst_27 = arith.constant dense<0.000000e+00> : vector<64x128xf32>
    %29 = tpu.matmul %27, %28, %cst_27 {dimension_numbers = #tpu.dot_dimension_numbers<[1], [0], [0], [1], [0, 0, 1, 1], [], []>} : vector<64x128xbf16>, vector<128x128xbf16>, vector<64x128xf32> -> vector<64x128xf32>
    %30 = arith.addf %24, %29 : vector<64x128xf32>
    %c1_28 = arith.constant 1 : index
    %c0_29 = arith.constant 0 : index
    %c0_30 = arith.constant 0 : index
    %31 = vector.load %arg9[%c1_28, %c0_29, %c0_30] : memref<10x10x128xf32, #tpu.memory_space<vmem>>, vector<8x8x128xf32>
    %32 = arith.truncf %31 : vector<8x8x128xf32> to vector<8x8x128xbf16>
    %33 = vector.shape_cast %32 : vector<8x8x128xbf16> to vector<64x128xbf16>
    %c384 = arith.constant 384 : index
    %c0_31 = arith.constant 0 : index
    %34 = vector.load %arg4[%c384, %c0_31] : memref<1152x128xbf16, #tpu.memory_space<vmem>>, vector<128x128xbf16>
    %cst_32 = arith.constant dense<0.000000e+00> : vector<64x128xf32>
    %35 = tpu.matmul %33, %34, %cst_32 {dimension_numbers = #tpu.dot_dimension_numbers<[1], [0], [0], [1], [0, 0, 1, 1], [], []>} : vector<64x128xbf16>, vector<128x128xbf16>, vector<64x128xf32> -> vector<64x128xf32>
    %36 = arith.addf %30, %35 : vector<64x128xf32>
    %c1_33 = arith.constant 1 : index
    %c1_34 = arith.constant 1 : index
    %c0_35 = arith.constant 0 : index
    %37 = vector.load %arg9[%c1_33, %c1_34, %c0_35] : memref<10x10x128xf32, #tpu.memory_space<vmem>>, vector<8x8x128xf32>
    %38 = arith.truncf %37 : vector<8x8x128xf32> to vector<8x8x128xbf16>
    %39 = vector.shape_cast %38 : vector<8x8x128xbf16> to vector<64x128xbf16>
    %c512 = arith.constant 512 : index
    %c0_36 = arith.constant 0 : index
    %40 = vector.load %arg4[%c512, %c0_36] : memref<1152x128xbf16, #tpu.memory_space<vmem>>, vector<128x128xbf16>
    %cst_37 = arith.constant dense<0.000000e+00> : vector<64x128xf32>
    %41 = tpu.matmul %39, %40, %cst_37 {dimension_numbers = #tpu.dot_dimension_numbers<[1], [0], [0], [1], [0, 0, 1, 1], [], []>} : vector<64x128xbf16>, vector<128x128xbf16>, vector<64x128xf32> -> vector<64x128xf32>
    %42 = arith.addf %36, %41 : vector<64x128xf32>
    %c1_38 = arith.constant 1 : index
    %c2_39 = arith.constant 2 : index
    %c0_40 = arith.constant 0 : index
    %43 = vector.load %arg9[%c1_38, %c2_39, %c0_40] : memref<10x10x128xf32, #tpu.memory_space<vmem>>, vector<8x8x128xf32>
    %44 = arith.truncf %43 : vector<8x8x128xf32> to vector<8x8x128xbf16>
    %45 = vector.shape_cast %44 : vector<8x8x128xbf16> to vector<64x128xbf16>
    %c640 = arith.constant 640 : index
    %c0_41 = arith.constant 0 : index
    %46 = vector.load %arg4[%c640, %c0_41] : memref<1152x128xbf16, #tpu.memory_space<vmem>>, vector<128x128xbf16>
    %cst_42 = arith.constant dense<0.000000e+00> : vector<64x128xf32>
    %47 = tpu.matmul %45, %46, %cst_42 {dimension_numbers = #tpu.dot_dimension_numbers<[1], [0], [0], [1], [0, 0, 1, 1], [], []>} : vector<64x128xbf16>, vector<128x128xbf16>, vector<64x128xf32> -> vector<64x128xf32>
    %48 = arith.addf %42, %47 : vector<64x128xf32>
    %c2_43 = arith.constant 2 : index
    %c0_44 = arith.constant 0 : index
    %c0_45 = arith.constant 0 : index
    %49 = vector.load %arg9[%c2_43, %c0_44, %c0_45] : memref<10x10x128xf32, #tpu.memory_space<vmem>>, vector<8x8x128xf32>
    %50 = arith.truncf %49 : vector<8x8x128xf32> to vector<8x8x128xbf16>
    %51 = vector.shape_cast %50 : vector<8x8x128xbf16> to vector<64x128xbf16>
    %c768 = arith.constant 768 : index
    %c0_46 = arith.constant 0 : index
    %52 = vector.load %arg4[%c768, %c0_46] : memref<1152x128xbf16, #tpu.memory_space<vmem>>, vector<128x128xbf16>
    %cst_47 = arith.constant dense<0.000000e+00> : vector<64x128xf32>
    %53 = tpu.matmul %51, %52, %cst_47 {dimension_numbers = #tpu.dot_dimension_numbers<[1], [0], [0], [1], [0, 0, 1, 1], [], []>} : vector<64x128xbf16>, vector<128x128xbf16>, vector<64x128xf32> -> vector<64x128xf32>
    %54 = arith.addf %48, %53 : vector<64x128xf32>
    %c2_48 = arith.constant 2 : index
    %c1_49 = arith.constant 1 : index
    %c0_50 = arith.constant 0 : index
    %55 = vector.load %arg9[%c2_48, %c1_49, %c0_50] : memref<10x10x128xf32, #tpu.memory_space<vmem>>, vector<8x8x128xf32>
    %56 = arith.truncf %55 : vector<8x8x128xf32> to vector<8x8x128xbf16>
    %57 = vector.shape_cast %56 : vector<8x8x128xbf16> to vector<64x128xbf16>
    %c896 = arith.constant 896 : index
    %c0_51 = arith.constant 0 : index
    %58 = vector.load %arg4[%c896, %c0_51] : memref<1152x128xbf16, #tpu.memory_space<vmem>>, vector<128x128xbf16>
    %cst_52 = arith.constant dense<0.000000e+00> : vector<64x128xf32>
    %59 = tpu.matmul %57, %58, %cst_52 {dimension_numbers = #tpu.dot_dimension_numbers<[1], [0], [0], [1], [0, 0, 1, 1], [], []>} : vector<64x128xbf16>, vector<128x128xbf16>, vector<64x128xf32> -> vector<64x128xf32>
    %60 = arith.addf %54, %59 : vector<64x128xf32>
    %c2_53 = arith.constant 2 : index
    %c2_54 = arith.constant 2 : index
    %c0_55 = arith.constant 0 : index
    %61 = vector.load %arg9[%c2_53, %c2_54, %c0_55] : memref<10x10x128xf32, #tpu.memory_space<vmem>>, vector<8x8x128xf32>
    %62 = arith.truncf %61 : vector<8x8x128xf32> to vector<8x8x128xbf16>
    %63 = vector.shape_cast %62 : vector<8x8x128xbf16> to vector<64x128xbf16>
    %c1024 = arith.constant 1024 : index
    %c0_56 = arith.constant 0 : index
    %64 = vector.load %arg4[%c1024, %c0_56] : memref<1152x128xbf16, #tpu.memory_space<vmem>>, vector<128x128xbf16>
    %cst_57 = arith.constant dense<0.000000e+00> : vector<64x128xf32>
    %65 = tpu.matmul %63, %64, %cst_57 {dimension_numbers = #tpu.dot_dimension_numbers<[1], [0], [0], [1], [0, 0, 1, 1], [], []>} : vector<64x128xbf16>, vector<128x128xbf16>, vector<64x128xf32> -> vector<64x128xf32>
    %66 = arith.addf %60, %65 : vector<64x128xf32>
    %c0_58 = arith.constant 0 : index
    %c0_59 = arith.constant 0 : index
    %67 = vector.load %arg5[%c0_58, %c0_59] : memref<1x128xf32, #tpu.memory_space<vmem>>, vector<1x128xf32>
    %68 = vector.broadcast %67 : vector<1x128xf32> to vector<64x128xf32>
    %69 = arith.addf %66, %68 : vector<64x128xf32>
    %cst_60 = arith.constant 0.000000e+00 : f32
    %70 = vector.broadcast %cst_60 : f32 to vector<64x128xf32>
    %71 = arith.maximumf %69, %70 : vector<64x128xf32>
    %72 = arith.truncf %71 : vector<64x128xf32> to vector<64x128xbf16>
    %c0_61 = arith.constant 0 : index
    %c0_62 = arith.constant 0 : index
    %73 = vector.load %arg6[%c0_61, %c0_62] : memref<128x128xbf16, #tpu.memory_space<vmem>>, vector<128x128xbf16>
    %cst_63 = arith.constant dense<0.000000e+00> : vector<64x128xf32>
    %74 = tpu.matmul %72, %73, %cst_63 {dimension_numbers = #tpu.dot_dimension_numbers<[1], [0], [0], [1], [0, 0, 1, 1], [], []>} : vector<64x128xbf16>, vector<128x128xbf16>, vector<64x128xf32> -> vector<64x128xf32>
    %c0_64 = arith.constant 0 : index
    %c0_65 = arith.constant 0 : index
    %75 = vector.load %arg7[%c0_64, %c0_65] : memref<1x128xf32, #tpu.memory_space<vmem>>, vector<1x128xf32>
    %76 = vector.broadcast %75 : vector<1x128xf32> to vector<64x128xf32>
    %77 = arith.addf %74, %76 : vector<64x128xf32>
    %78 = arith.extf %0 : vector<64x128xbf16> to vector<64x128xf32>
    %79 = arith.addf %77, %78 : vector<64x128xf32>
    %cst_66 = arith.constant 0.000000e+00 : f32
    %80 = vector.broadcast %cst_66 : f32 to vector<64x128xf32>
    %81 = arith.maximumf %79, %80 : vector<64x128xf32>
    %c0_67 = arith.constant 0 : index
    %c0_68 = arith.constant 0 : index
    %82 = vector.load %arg8[%c0_67, %c0_68] : memref<64x128xf32, #tpu.memory_space<vmem>>, vector<64x128xf32>
    tpu.vector_store %arg8[%c0_67, %c0_68], %81 {strides = array<i32>} : memref<64x128xf32, #tpu.memory_space<vmem>>, vector<64x128xf32>,
    return
  }
  func.func @transform_0(%arg0: i32) -> (i32, i32) {
    %c0_i32 = arith.constant 0 : i32
    %c0_i32_0 = arith.constant 0 : i32
    return %arg0, %c0_i32 : i32, i32
  }
  func.func @transform_1(%arg0: i32) -> (i32, i32) {
    %c0_i32 = arith.constant 0 : i32
    %c0_i32_0 = arith.constant 0 : i32
    %c0_i32_1 = arith.constant 0 : i32
    return %c0_i32, %c0_i32_0 : i32, i32
  }
  func.func @transform_2(%arg0: i32) -> (i32, i32) {
    %c0_i32 = arith.constant 0 : i32
    %c0_i32_0 = arith.constant 0 : i32
    %c0_i32_1 = arith.constant 0 : i32
    return %c0_i32, %c0_i32_0 : i32, i32
  }
  func.func @transform_3(%arg0: i32) -> (i32, i32) {
    %c0_i32 = arith.constant 0 : i32
    %c0_i32_0 = arith.constant 0 : i32
    %c0_i32_1 = arith.constant 0 : i32
    return %c0_i32, %c0_i32_0 : i32, i32
  }
  func.func @transform_4(%arg0: i32) -> (i32, i32) {
    %c0_i32 = arith.constant 0 : i32
    %c0_i32_0 = arith.constant 0 : i32
    %c0_i32_1 = arith.constant 0 : i32
    return %c0_i32, %c0_i32_0 : i32, i32
  }
  func.func @transform_5(%arg0: i32) -> (i32, i32) {
    %c0_i32 = arith.constant 0 : i32
    %c0_i32_0 = arith.constant 0 : i32
    %c0_i32_1 = arith.constant 0 : i32
    return %c0_i32, %c0_i32_0 : i32, i32
  }
  func.func @transform_6(%arg0: i32) -> (i32, i32) {
    %c0_i32 = arith.constant 0 : i32
    %c0_i32_0 = arith.constant 0 : i32
    %c0_i32_1 = arith.constant 0 : i32
    return %c0_i32, %c0_i32_0 : i32, i32
  }
  func.func @transform_7(%arg0: i32) -> (i32, i32) {
    %c0_i32 = arith.constant 0 : i32
    %c0_i32_0 = arith.constant 0 : i32
    return %arg0, %c0_i32 : i32, i32
  }
}

</mosaic_0001>

<llo_original>
// kernel: _lambda_.1
$region0: #{_lambda_.1}
  #allocation0 [shape = 'u32[]', space=smem, size = 0x4, offset = 0x4, fixed_abs, tag = 'smem constant byte address 0x4 - core index']
  #allocation1 [shape = 'u32[144,128]{1,0:T(1,128)}', space=vmem, size = 0x12000, scoped, tag = 'internal scratch']
  #allocation2 [shape = 'f32[10,10,128]{2,1,0:T(8,128)}', space=vmem, size = 0x14000, scoped, tag = 'scratch operand']
  %s0 = inlined_call_operand.vmem [shape: bf16[128,128], index: 0, kind: input, shape index: {}]
  %s1 = inlined_call_operand.vmem [shape: bf16[128,128], index: 1, kind: input, shape index: {}]
  %s2 = inlined_call_operand.vmem [shape: f32[1,128], index: 2, kind: input, shape index: {}]
  %s3 = inlined_call_operand.hbm [shape: bf16[1152,128], index: 3, kind: input, shape index: {}]
  %s4 = inlined_call_operand.vmem [shape: f32[1,128], index: 4, kind: input, shape index: {}]
  %s5 = inlined_call_operand.vmem [shape: bf16[128,128], index: 5, kind: input, shape index: {}]
  %s6 = inlined_call_operand.vmem [shape: f32[1,128], index: 6, kind: input, shape index: {}]
  %s7 = inlined_call_operand.vmem [shape: f32[128,128], index: 7, kind: output, shape index: {}]
  %s8 = sld [smem:[#allocation0]]
  $region65: #{_lambda_.1} parent=0
    _
  %s10 = ssub.s32 1, %s8
  %s11 = scalar_select 0, %s10, %s8
  $region1: #{_lambda_.1} parent=0
    #allocation3 [shape = 'u8[294912]{0}', space=vmem, size = 0x48000, scoped, tag = 'input window, operand 3, single buffered']
    #allocation4 [shape = 's32[2]{0}', space=sflag, size = 0x8, scoped, tag = 'scoped memory for _lambda_.1']
    %12 = vsyncpa [#allocation4], 0
    loop: start=0, step=1, limit=4
    $region2: #{_lambda_.1} parent=1 // loop_pre_header
      _
    $region3: #{_lambda_.1} parent=1 // loop_header
      %s14 = sphi 0, %s18
      %p15 = scmp.ge.s32.totalorder %s14, 4
      %s24 = sphi 0, %s26
      %s27 = sphi 0, %s24
      %s28 = sphi 0, %s27
      %s44 = sphi 0, %s28
      %s48 = sphi 0, %s48
      %s50 = sphi 0, %s48
      %s51 = sphi 0, %s50
      %s65 = sphi 0, %s51
      %s69 = sphi 0, %s69
      %s71 = sphi 0, %s69
      %s72 = sphi 0, %s71
      %s86 = sphi 0, %s72
      %s90 = sphi 0, %s90
      %s92 = sphi 0, %s90
      %s93 = sphi 0, %s92
      %s107 = sphi 0, %s93
      %s111 = sphi 0, %s111
      %s113 = sphi 0, %s111
      %s114 = sphi 0, %s113
      %s128 = sphi 0, %s114
      %s132 = sphi 0, %s132
      %s134 = sphi 0, %s132
      %s135 = sphi 0, %s134
      %s149 = sphi 0, %s135
      %s153 = sphi 0, %s153
      %s155 = sphi 0, %s153
      %s156 = sphi 0, %s155
      %s170 = sphi 0, %s156
      %s176 = sphi 0, %s178
      %s179 = sphi 0, %s176
      %s180 = sphi 0, %s179
      %s196 = sphi 0, %s180
    $region4: #{_lambda_.1} parent=1 // loop_header_branch
      %17 = sbr.rel (%p15) target = $region8
    $region5: #{_lambda_.1} parent=1 // loop_body
      %s19 = ssub.s32 %s14, 1
      %s20 = ssub.s32 %s14, 2
      %s21 = sadd.s32 %s14, 1
      %s22 = ssub.s32 %s14, %s21
      %p23 = scmp.eq.s32.totalorder %s22, 0
      %s25 = sadd.s32 %s24, 1
      %s26 = scalar_select %p23, %s24, %s25
      %p29 = pneg %p23
      %p30 = scmp.eq.s32.totalorder %s14, 1
      %p31 = por %p29, %p30
      %p32 = scmp.ne.s32.totalorder %s24, %s27
      %p33 = scmp.eq.s32.totalorder %s14, 0
      %p34 = por %p32, %p33
      %p35 = scmp.ne.s32.totalorder %s24, %s27
      %p36 = scmp.eq.s32.totalorder %s19, 1
      %p37 = por %p35, %p36
      %p38 = scmp.ne.s32.totalorder %s27, %s28
      %p39 = scmp.eq.s32.totalorder %s19, 0
      %p40 = por %p38, %p39
      %p41 = scmp.ne.s32.totalorder %s27, %s28
      %p42 = scmp.eq.s32.totalorder %s20, 1
      %p43 = por %p41, %p42
      %p45 = scmp.ne.s32.totalorder %s28, %s44
      %p46 = scmp.eq.s32.totalorder %s20, 0
      %p47 = por %p45, %p46
      %s49 = sadd.s32 %s48, 1
      %p52 = scmp.eq.s32.totalorder %s14, 1
      %p53 = scmp.ne.s32.totalorder %s48, %s50
      %p54 = scmp.eq.s32.totalorder %s14, 0
      %p55 = por %p53, %p54
      %p56 = scmp.ne.s32.totalorder %s48, %s50
      %p57 = scmp.eq.s32.totalorder %s19, 1
      %p58 = por %p56, %p57
      %p59 = scmp.ne.s32.totalorder %s50, %s51
      %p60 = scmp.eq.s32.totalorder %s19, 0
      %p61 = por %p59, %p60
      %p62 = scmp.ne.s32.totalorder %s50, %s51
      %p63 = scmp.eq.s32.totalorder %s20, 1
      %p64 = por %p62, %p63
      %p66 = scmp.ne.s32.totalorder %s51, %s65
      %p67 = scmp.eq.s32.totalorder %s20, 0
      %p68 = por %p66, %p67
      %s70 = sadd.s32 %s69, 1
      %p73 = scmp.eq.s32.totalorder %s14, 1
      %p74 = scmp.ne.s32.totalorder %s69, %s71
      %p75 = scmp.eq.s32.totalorder %s14, 0
      %p76 = por %p74, %p75
      %p77 = scmp.ne.s32.totalorder %s69, %s71
      %p78 = scmp.eq.s32.totalorder %s19, 1
      %p79 = por %p77, %p78
      %p80 = scmp.ne.s32.totalorder %s71, %s72
      %p81 = scmp.eq.s32.totalorder %s19, 0
      %p82 = por %p80, %p81
      %p83 = scmp.ne.s32.totalorder %s71, %s72
      %p84 = scmp.eq.s32.totalorder %s20, 1
      %p85 = por %p83, %p84
      %p87 = scmp.ne.s32.totalorder %s72, %s86
      %p88 = scmp.eq.s32.totalorder %s20, 0
      %p89 = por %p87, %p88
      %s91 = sadd.s32 %s90, 1
      %p94 = scmp.eq.s32.totalorder %s14, 1
      %p95 = scmp.ne.s32.totalorder %s90, %s92
      %p96 = scmp.eq.s32.totalorder %s14, 0
      %p97 = por %p95, %p96
      %p98 = scmp.ne.s32.totalorder %s90, %s92
      %p99 = scmp.eq.s32.totalorder %s19, 1
      %p100 = por %p98, %p99
      %p101 = scmp.ne.s32.totalorder %s92, %s93
      %p102 = scmp.eq.s32.totalorder %s19, 0
      %p103 = por %p101, %p102
      %p104 = scmp.ne.s32.totalorder %s92, %s93
      %p105 = scmp.eq.s32.totalorder %s20, 1
      %p106 = por %p104, %p105
      %p108 = scmp.ne.s32.totalorder %s93, %s107
      %p109 = scmp.eq.s32.totalorder %s20, 0
      %p110 = por %p108, %p109
      %s112 = sadd.s32 %s111, 1
      %p115 = scmp.eq.s32.totalorder %s14, 1
      %p116 = scmp.ne.s32.totalorder %s111, %s113
      %p117 = scmp.eq.s32.totalorder %s14, 0
      %p118 = por %p116, %p117
      %p119 = scmp.ne.s32.totalorder %s111, %s113
      %p120 = scmp.eq.s32.totalorder %s19, 1
      %p121 = por %p119, %p120
      %p122 = scmp.ne.s32.totalorder %s113, %s114
      %p123 = scmp.eq.s32.totalorder %s19, 0
      %p124 = por %p122, %p123
      %p125 = scmp.ne.s32.totalorder %s113, %s114
      %p126 = scmp.eq.s32.totalorder %s20, 1
      %p127 = por %p125, %p126
      %p129 = scmp.ne.s32.totalorder %s114, %s128
      %p130 = scmp.eq.s32.totalorder %s20, 0
      %p131 = por %p129, %p130
      %s133 = sadd.s32 %s132, 1
      %p136 = scmp.eq.s32.totalorder %s14, 1
      %p137 = scmp.ne.s32.totalorder %s132, %s134
      %p138 = scmp.eq.s32.totalorder %s14, 0
      %p139 = por %p137, %p138
      %p140 = scmp.ne.s32.totalorder %s132, %s134
      %p141 = scmp.eq.s32.totalorder %s19, 1
      %p142 = por %p140, %p141
      %p143 = scmp.ne.s32.totalorder %s134, %s135
      %p144 = scmp.eq.s32.totalorder %s19, 0
      %p145 = por %p143, %p144
      %p146 = scmp.ne.s32.totalorder %s134, %s135
      %p147 = scmp.eq.s32.totalorder %s20, 1
      %p148 = por %p146, %p147
      %p150 = scmp.ne.s32.totalorder %s135, %s149
      %p151 = scmp.eq.s32.totalorder %s20, 0
      %p152 = por %p150, %p151
      %s154 = sadd.s32 %s153, 1
      %p157 = scmp.eq.s32.totalorder %s14, 1
      %p158 = scmp.ne.s32.totalorder %s153, %s155
      %p159 = scmp.eq.s32.totalorder %s14, 0
      %p160 = por %p158, %p159
      %p161 = scmp.ne.s32.totalorder %s153, %s155
      %p162 = scmp.eq.s32.totalorder %s19, 1
      %p163 = por %p161, %p162
      %p164 = scmp.ne.s32.totalorder %s155, %s156
      %p165 = scmp.eq.s32.totalorder %s19, 0
      %p166 = por %p164, %p165
      %p167 = scmp.ne.s32.totalorder %s155, %s156
      %p168 = scmp.eq.s32.totalorder %s20, 1
      %p169 = por %p167, %p168
      %p171 = scmp.ne.s32.totalorder %s156, %s170
      %p172 = scmp.eq.s32.totalorder %s20, 0
      %p173 = por %p171, %p172
      %s174 = ssub.s32 %s14, %s21
      %p175 = scmp.eq.s32.totalorder %s174, 0
      %s177 = sadd.s32 %s176, 1
      %s178 = scalar_select %p175, %s176, %s177
      %p181 = pneg %p175
      %p182 = scmp.eq.s32.totalorder %s14, 1
      %p183 = por %p181, %p182
      %p184 = scmp.ne.s32.totalorder %s176, %s179
      %p185 = scmp.eq.s32.totalorder %s14, 0
      %p186 = por %p184, %p185
      %p187 = scmp.ne.s32.totalorder %s176, %s179
      %p188 = scmp.eq.s32.totalorder %s19, 1
      %p189 = por %p187, %p188
      %p190 = scmp.ne.s32.totalorder %s179, %s180
      %p191 = scmp.eq.s32.totalorder %s19, 0
      %p192 = por %p190, %p191
      %p193 = scmp.ne.s32.totalorder %s179, %s180
      %p194 = scmp.eq.s32.totalorder %s20, 1
      %p195 = por %p193, %p194
      %p197 = scmp.ne.s32.totalorder %s180, %s196
      %p198 = scmp.eq.s32.totalorder %s20, 0
      %p199 = por %p197, %p198
      %p200 = scmp.le.s32.totalorder 1, %s14
      %p201 = scmp.lt.s32.totalorder %s14, 3
      %p202 = pnand %p200, %p201
      %p203 = pneg %p202
      // Predicated region
      $region9: #{_lambda_.1} parent=5 // pred_check
        _
      $region10: #{_lambda_.1} parent=5 // pred_check_branch
        %205 = sbr.rel (%p202) target = $region12
      $region11: #{_lambda_.1} parent=5 // pred_region
        %s206 = ssub.s32 %s14, 1
        // Predicated region
        $region13: #{_lambda_.1} parent=11 // pred_check
          %p207 = pneg %p61
        $region14: #{_lambda_.1} parent=11 // pred_check_branch
          %209 = sbr.rel (%p207) target = $region16
        $region15: #{_lambda_.1} parent=11 // pred_region
          _
        $region16: #{_lambda_.1} parent=11 // pred_fallthru
          _
        // Predicated region
        $region17: #{_lambda_.1} parent=11 // pred_check
          %p210 = pneg %p82
        $region18: #{_lambda_.1} parent=11 // pred_check_branch
          %212 = sbr.rel (%p210) target = $region20
        $region19: #{_lambda_.1} parent=11 // pred_region
          _
        $region20: #{_lambda_.1} parent=11 // pred_fallthru
          _
        // Predicated region
        $region21: #{_lambda_.1} parent=11 // pred_check
          %p213 = pneg %p103
        $region22: #{_lambda_.1} parent=11 // pred_check_branch
          %215 = sbr.rel (%p213) target = $region24
        $region23: #{_lambda_.1} parent=11 // pred_region
          %s217 = ssub.s32 9216, 9216
          %218 = vsyncadd [#allocation4], %s217
          %s219 = sshll.u32 [#allocation3], 4
          %s220 = int_to_ptr.vmem [resolvable:$true] %s219
          %225 = dma.hbm_to_vmem [thread:$0]  %s3, 9216, %s220, [#allocation4], 64, 64, 4
        $region24: #{_lambda_.1} parent=11 // pred_fallthru
          _
        // Predicated region
        $region25: #{_lambda_.1} parent=11 // pred_check
          %p226 = pneg %p124
        $region26: #{_lambda_.1} parent=11 // pred_check_branch
          %228 = sbr.rel (%p226) target = $region28
        $region27: #{_lambda_.1} parent=11 // pred_region
          _
        $region28: #{_lambda_.1} parent=11 // pred_fallthru
          _
        // Predicated region
        $region29: #{_lambda_.1} parent=11 // pred_check
          %p229 = pneg %p145
        $region30: #{_lambda_.1} parent=11 // pred_check_branch
          %231 = sbr.rel (%p229) target = $region32
        $region31: #{_lambda_.1} parent=11 // pred_region
          _
        $region32: #{_lambda_.1} parent=11 // pred_fallthru
          _
        // Predicated region
        $region33: #{_lambda_.1} parent=11 // pred_check
          %p232 = pneg %p166
        $region34: #{_lambda_.1} parent=11 // pred_check_branch
          %234 = sbr.rel (%p232) target = $region36
        $region35: #{_lambda_.1} parent=11 // pred_region
          _
        $region36: #{_lambda_.1} parent=11 // pred_fallthru
          _
      $region12: #{_lambda_.1} parent=5 // pred_fallthru
        _
      %p235 = scmp.lt.s32.totalorder %s14, 2
      // Predicated region
      $region37: #{_lambda_.1} parent=5 // pred_check
        %p236 = pneg %p235
      $region38: #{_lambda_.1} parent=5 // pred_check_branch
        %238 = sbr.rel (%p236) target = $region40
      $region39: #{_lambda_.1} parent=5 // pred_region
        // Predicated region
        $region41: #{_lambda_.1} parent=39 // pred_check
          %p239 = pneg %p34
        $region42: #{_lambda_.1} parent=39 // pred_check_branch
          %241 = sbr.rel (%p239) target = $region44
        $region43: #{_lambda_.1} parent=39 // pred_region
          %s242 = smul.u32 8, %s14
          %p243 = scmp.lt.s32.totalorder %s242, 15
          %s244 = scalar_select %p243, %s242, 15
          %s245 = smul.addr %s244, 4
          %s246 = scalar_lea.vmem %s0, %s245
          %s247 = smul.u32 8, %s14
        $region44: #{_lambda_.1} parent=39 // pred_fallthru
          _
      $region40: #{_lambda_.1} parent=5 // pred_fallthru
        _
      %p248 = scmp.le.s32.totalorder 1, %s14
      %p249 = scmp.lt.s32.totalorder %s14, 3
      %p250 = pnand %p248, %p249
      %p251 = pneg %p250
      // Predicated region
      $region45: #{_lambda_.1} parent=5 // pred_check
        _
      $region46: #{_lambda_.1} parent=5 // pred_check_branch
        %253 = sbr.rel (%p250) target = $region48
      $region47: #{_lambda_.1} parent=5 // pred_region
        %s254 = ssub.s32 %s14, 1
        // Predicated region
        $region49: #{_lambda_.1} parent=47 // pred_check
          %p255 = pneg %p103
        $region50: #{_lambda_.1} parent=47 // pred_check_branch
          %257 = sbr.rel (%p255) target = $region52
        $region51: #{_lambda_.1} parent=47 // pred_region
          %258 = dma.done [#allocation4], 9216
        $region52: #{_lambda_.1} parent=47 // pred_fallthru
          _
        %s259 = smul.u32 8, %s19
        %p260 = scmp.lt.s32.totalorder %s259, 15
        %s261 = scalar_select %p260, %s259, 15
        %s262 = smul.addr %s261, 4
        %s263 = scalar_lea.vmem %s0, %s262
        %p264 = pneg %p40
        %p265 = pneg %p37
        %p266 = pneg %p61
        %p267 = pneg %p58
        %p268 = pneg %p82
        %p269 = pneg %p79
        %p270 = pneg %p103
        %p271 = pneg %p100
        %p272 = pneg %p124
        %p273 = pneg %p121
        %p274 = pneg %p145
        %p275 = pneg %p142
        %p276 = pneg %p166
        %p277 = pneg %p163
        %p278 = pneg %p192
        %p279 = pneg %p189
        %s280 = smul.u32 8, %s19
        %p281 = scmp.lt.s32.totalorder %s280, 15
        %s282 = scalar_select %p281, %s280, 15
        %s283 = smul.addr %s282, 8
        %s284 = scalar_lea.vmem %s7, %s283
        %s285 = smul.u32 8, %s19
        %p286 = scmp.lt.s32.totalorder %s285, 15
        %s287 = scalar_select %p286, %s285, 15
        %s288 = smul.addr %s287, 4
        %s289 = scalar_lea.vmem %s0, %s288
        %s290 = smul.u32 8, %s19
        %s291 = smul.u32 8, %s19
        %p292 = scmp.lt.s32.totalorder %s291, 15
        %s293 = scalar_select %p292, %s291, 15
        %s294 = smul.addr %s293, 8
        %s295 = scalar_lea.vmem %s7, %s294
        %s296 = smul.u32 8, %s19
        %v298 = vld [vmem:[%s289] sm:$0xf]
        %v299 = vld [vmem:[%s289 + $0x4] sm:$0xf]
        %v300 = vld [vmem:[%s289 + $0x8] sm:$0xf]
        %v301 = vld [vmem:[%s289 + $0xc] sm:$0xf]
        %v302 = vld [vmem:[%s289 + $0x10] sm:$0xf]
        %v303 = vld [vmem:[%s289 + $0x14] sm:$0xf]
        %v304 = vld [vmem:[%s289 + $0x18] sm:$0xf]
        %v305 = vld [vmem:[%s289 + $0x1c] sm:$0xf]
        %v306 = vld [vmem:[%s1] sm:$0xf]
        %v307 = vld [vmem:[%s1 + $0x4] sm:$0xf]
        %v308 = vld [vmem:[%s1 + $0x8] sm:$0xf]
        %v309 = vld [vmem:[%s1 + $0xc] sm:$0xf]
        %v310 = vld [vmem:[%s1 + $0x10] sm:$0xf]
        %v311 = vld [vmem:[%s1 + $0x14] sm:$0xf]
        %v312 = vld [vmem:[%s1 + $0x18] sm:$0xf]
        %v313 = vld [vmem:[%s1 + $0x1c] sm:$0xf]
        %v314 = vld [vmem:[%s1 + $0x20] sm:$0xf]
        %v315 = vld [vmem:[%s1 + $0x24] sm:$0xf]
        %v316 = vld [vmem:[%s1 + $0x28] sm:$0xf]
        %v317 = vld [vmem:[%s1 + $0x2c] sm:$0xf]
        %v318 = vld [vmem:[%s1 + $0x30] sm:$0xf]
        %v319 = vld [vmem:[%s1 + $0x34] sm:$0xf]
        %v320 = vld [vmem:[%s1 + $0x38] sm:$0xf]
        %v321 = vld [vmem:[%s1 + $0x3c] sm:$0xf]
        %v322 = vld [vmem:[%s2] sm:$0x1]
        %v324 = vlaneseq
        %v325 = vshrl.u32 %v324, 7
        %v326 = vsub.s32 0, %v325
        %v327 = vrot.slane %v322, %v326
        %v337 = vunpack.c.l.b16 %v298
        %v338 = vunpack.c.l.b16 %v299
        %v339 = vunpack.c.l.b16 %v300
        %v340 = vunpack.c.l.b16 %v301
        %v341 = vunpack.c.l.b16 %v302
        %v342 = vunpack.c.l.b16 %v303
        %v343 = vunpack.c.l.b16 %v304
        %v344 = vunpack.c.l.b16 %v305
        %v345 = vpack.c.b16 %v338, %v337
        %v346 = vpack.c.b16 %v340, %v339
        %v347 = vpack.c.b16 %v342, %v341
        %v348 = vpack.c.b16 %v344, %v343
        %v369 = vunpack.c.l.b16 %v306
        %v370 = vunpack.c.l.b16 %v307
        %v371 = vunpack.c.l.b16 %v308
        %v372 = vunpack.c.l.b16 %v309
        %v373 = vunpack.c.l.b16 %v310
        %v374 = vunpack.c.l.b16 %v311
        %v375 = vunpack.c.l.b16 %v312
        %v376 = vunpack.c.l.b16 %v313
        %v377 = vunpack.c.l.b16 %v314
        %v378 = vunpack.c.l.b16 %v315
        %v379 = vunpack.c.l.b16 %v316
        %v380 = vunpack.c.l.b16 %v317
        %v381 = vunpack.c.l.b16 %v318
        %v382 = vunpack.c.l.b16 %v319
        %v383 = vunpack.c.l.b16 %v320
        %v384 = vunpack.c.l.b16 %v321
        %v385 = vpack.c.b16 %v370, %v369
        %v386 = vpack.c.b16 %v372, %v371
        %v387 = vpack.c.b16 %v374, %v373
        %v388 = vpack.c.b16 %v376, %v375
        %v389 = vpack.c.b16 %v378, %v377
        %v390 = vpack.c.b16 %v380, %v379
        %v391 = vpack.c.b16 %v382, %v381
        %v392 = vpack.c.b16 %v384, %v383
        %401 = vmatprep.subr.bf16.mxu0 0
        %402 = vmatpush1.bf16.msra.mxu0 %v392
        %403 = vmatprep.subr.bf16.mxu0 0
        %404 = vmatpush1.bf16.msra.mxu0 %v391
        %405 = vmatprep.subr.bf16.mxu0 0
        %406 = vmatpush1.bf16.msra.mxu0 %v390
        %407 = vmatprep.subr.bf16.mxu0 0
        %408 = vmatpush1.bf16.msra.mxu0 %v389
        %409 = vmatprep.subr.bf16.mxu0 0
        %410 = vmatpush1.bf16.msra.mxu0 %v388
        %411 = vmatprep.subr.bf16.mxu0 0
        %412 = vmatpush1.bf16.msra.mxu0 %v387
        %413 = vmatprep.subr.bf16.mxu0 0
        %414 = vmatpush1.bf16.msra.mxu0 %v386
        %415 = vmatprep.subr.bf16.mxu0 0
        %416 = vmatpush1.bf16.msra.mxu0 %v385
        %417 = vmatprep.subr.bf16.mxu0 0
        %418 = vmatpush2.bf16.msra.mxu0 0
        %419 = vmatprep.subr.bf16.mxu0 0
        %420 = vmatpush2.bf16.msra.mxu0 0
        %421 = vmatprep.subr.bf16.mxu0 0
        %422 = vmatpush2.bf16.msra.mxu0 0
        %423 = vmatprep.subr.bf16.mxu0 0
        %424 = vmatpush2.bf16.msra.mxu0 0
        %425 = vmatprep.subr.bf16.mxu0 0
        %426 = vmatpush2.bf16.msra.mxu0 0
        %427 = vmatprep.subr.bf16.mxu0 0
        %428 = vmatpush2.bf16.msra.mxu0 0
        %429 = vmatprep.subr.bf16.mxu0 0
        %430 = vmatpush2.bf16.msra.mxu0 0
        %431 = vmatprep.subr.bf16.mxu0 0
        %432 = vmatpush2.bf16.msra.mxu0 0
        %433 = vmatprep.mubr.bf16.mxu0 0
        %434 = vmatmul.mubr.bf16.gmra.mxu0 %v345
        %v435 = vpop.f32.mrf.mxu0
        %v436 = vadd.f32 %v327, %v435
        %v437 = vpop.f32.mrf.mxu0
        %v438 = vpop.f32.mrf.mxu0
        %v439 = vadd.f32 %v327, %v438
        %v440 = vpop.f32.mrf.mxu0
        %441 = vmatprep.mubr.bf16.mxu0 0
        %442 = vmatmul.mubr.bf16.gmra.mxu0 %v346
        %v443 = vpop.f32.mrf.mxu0
        %v444 = vadd.f32 %v327, %v443
        %v445 = vpop.f32.mrf.mxu0
        %v446 = vpop.f32.mrf.mxu0
        %v447 = vadd.f32 %v327, %v446
        %v448 = vpop.f32.mrf.mxu0
        %449 = vmatprep.mubr.bf16.mxu0 0
        %450 = vmatmul.mubr.bf16.gmra.mxu0 %v347
        %v451 = vpop.f32.mrf.mxu0
        %v452 = vadd.f32 %v327, %v451
        %v453 = vpop.f32.mrf.mxu0
        %v454 = vpop.f32.mrf.mxu0
        %v455 = vadd.f32 %v327, %v454
        %v456 = vpop.f32.mrf.mxu0
        %457 = vmatprep.mubr.bf16.mxu0 0
        %458 = vmatmul.mubr.bf16.gmra.mxu0 %v348
        %v459 = vpop.f32.mrf.mxu0
        %v460 = vadd.f32 %v327, %v459
        %v461 = vpop.f32.mrf.mxu0
        %v462 = vpop.f32.mrf.mxu0
        %v463 = vadd.f32 %v327, %v462
        %v464 = vpop.f32.mrf.mxu0
        %465 = vdwg.mxu0
        %v466 = vmax.f32 %v436, 0.0
        %v467 = vmax.f32 %v439, 0.0
        %v468 = vmax.f32 %v444, 0.0
        %v469 = vmax.f32 %v447, 0.0
        %v470 = vmax.f32 %v452, 0.0
        %v471 = vmax.f32 %v455, 0.0
        %v472 = vmax.f32 %v460, 0.0
        %v473 = vmax.f32 %v463, 0.0
        %474 = vst [vmem:[#allocation2] sm:$0xff] 0.0
        %475 = vst [vmem:[#allocation2 + $0x8] sm:$0x3] 0.0
        %476 = vst [vmem:[#allocation2 + $0x10] sm:$0xff] 0.0
        %477 = vst [vmem:[#allocation2 + $0x18] sm:$0x3] 0.0
        %478 = vst [vmem:[#allocation2 + $0x20] sm:$0xff] 0.0
        %479 = vst [vmem:[#allocation2 + $0x28] sm:$0x3] 0.0
        %480 = vst [vmem:[#allocation2 + $0x30] sm:$0xff] 0.0
        %481 = vst [vmem:[#allocation2 + $0x38] sm:$0x3] 0.0
        %482 = vst [vmem:[#allocation2 + $0x40] sm:$0xff] 0.0
        %483 = vst [vmem:[#allocation2 + $0x48] sm:$0x3] 0.0
        %484 = vst [vmem:[#allocation2 + $0x50] sm:$0xff] 0.0
        %485 = vst [vmem:[#allocation2 + $0x58] sm:$0x3] 0.0
        %486 = vst [vmem:[#allocation2 + $0x60] sm:$0xff] 0.0
        %487 = vst [vmem:[#allocation2 + $0x68] sm:$0x3] 0.0
        %488 = vst [vmem:[#allocation2 + $0x70] sm:$0xff] 0.0
        %489 = vst [vmem:[#allocation2 + $0x78] sm:$0x3] 0.0
        %490 = vst [vmem:[#allocation2 + $0x80] sm:$0xff] 0.0
        %491 = vst [vmem:[#allocation2 + $0x88] sm:$0x3] 0.0
        %492 = vst [vmem:[#allocation2 + $0x90] sm:$0xff] 0.0
        %493 = vst [vmem:[#allocation2 + $0x98] sm:$0x3] 0.0
        %s494 = scalar_lea.vmem [#allocation2], 16
        %495 = vst [vmem:[%s494 + $0x1] sm:$0xff] %v466
        %496 = vst [vmem:[%s494 + $0x11] sm:$0xff] %v467
        %497 = vst [vmem:[%s494 + $0x21] sm:$0xff] %v468
        %498 = vst [vmem:[%s494 + $0x31] sm:$0xff] %v469
        %499 = vst [vmem:[%s494 + $0x41] sm:$0xff] %v470
        %500 = vst [vmem:[%s494 + $0x51] sm:$0xff] %v471
        %501 = vst [vmem:[%s494 + $0x61] sm:$0xff] %v472
        %502 = vst [vmem:[%s494 + $0x71] sm:$0xff] %v473
        %v503 = vld [vmem:[#allocation2] sm:$0xff]
        %v504 = vld [vmem:[#allocation2 + $0x10] sm:$0xff]
        %v505 = vld [vmem:[#allocation2 + $0x20] sm:$0xff]
        %v506 = vld [vmem:[#allocation2 + $0x30] sm:$0xff]
        %v507 = vld [vmem:[#allocation2 + $0x40] sm:$0xff]
        %v508 = vld [vmem:[#allocation2 + $0x50] sm:$0xff]
        %v509 = vld [vmem:[#allocation2 + $0x60] sm:$0xff]
        %v510 = vld [vmem:[#allocation2 + $0x70] sm:$0xff]
        %v511 = vpack.c.bf16 %v503, %v503
        %v512 = vpack.c.bf16 %v504, %v504
        %v513 = vpack.c.bf16 %v505, %v505
        %v514 = vpack.c.bf16 %v506, %v506
        %v515 = vpack.c.bf16 %v507, %v507
        %v516 = vpack.c.bf16 %v508, %v508
        %v517 = vpack.c.bf16 %v509, %v509
        %v518 = vpack.c.bf16 %v510, %v510
        %v519 = vld [vmem:[#allocation3] sm:$0xf]
        %v520 = vld [vmem:[#allocation3 + $0x4] sm:$0xf]
        %v521 = vld [vmem:[#allocation3 + $0x8] sm:$0xf]
        %v522 = vld [vmem:[#allocation3 + $0xc] sm:$0xf]
        %v523 = vld [vmem:[#allocation3 + $0x10] sm:$0xf]
        %v524 = vld [vmem:[#allocation3 + $0x14] sm:$0xf]
        %v525 = vld [vmem:[#allocation3 + $0x18] sm:$0xf]
        %v526 = vld [vmem:[#allocation3 + $0x1c] sm:$0xf]
        %v527 = vld [vmem:[#allocation3 + $0x20] sm:$0xf]
        %v528 = vld [vmem:[#allocation3 + $0x24] sm:$0xf]
        %v529 = vld [vmem:[#allocation3 + $0x28] sm:$0xf]
        %v530 = vld [vmem:[#allocation3 + $0x2c] sm:$0xf]
        %v531 = vld [vmem:[#allocation3 + $0x30] sm:$0xf]
        %v532 = vld [vmem:[#allocation3 + $0x34] sm:$0xf]
        %v533 = vld [vmem:[#allocation3 + $0x38] sm:$0xf]
        %v534 = vld [vmem:[#allocation3 + $0x3c] sm:$0xf]
        %v535 = vld [vmem:[#allocation2 + $0x1] sm:$0xff]
        %v536 = vld [vmem:[#allocation2 + $0x11] sm:$0xff]
        %v537 = vld [vmem:[#allocation2 + $0x21] sm:$0xff]
        %v538 = vld [vmem:[#allocation2 + $0x31] sm:$0xff]
        %v539 = vld [vmem:[#allocation2 + $0x41] sm:$0xff]
        %v540 = vld [vmem:[#allocation2 + $0x51] sm:$0xff]
        %v541 = vld [vmem:[#allocation2 + $0x61] sm:$0xff]
        %v542 = vld [vmem:[#allocation2 + $0x71] sm:$0xff]
        %v543 = vpack.c.bf16 %v535, %v535
        %v544 = vpack.c.bf16 %v536, %v536
        %v545 = vpack.c.bf16 %v537, %v537
        %v546 = vpack.c.bf16 %v538, %v538
        %v547 = vpack.c.bf16 %v539, %v539
        %v548 = vpack.c.bf16 %v540, %v540
        %v549 = vpack.c.bf16 %v541, %v541
        %v550 = vpack.c.bf16 %v542, %v542
        %v551 = vld [vmem:[#allocation3 + $0x40] sm:$0xf]
        %v552 = vld [vmem:[#allocation3 + $0x44] sm:$0xf]
        %v553 = vld [vmem:[#allocation3 + $0x48] sm:$0xf]
        %v554 = vld [vmem:[#allocation3 + $0x4c] sm:$0xf]
        %v555 = vld [vmem:[#allocation3 + $0x50] sm:$0xf]
        %v556 = vld [vmem:[#allocation3 + $0x54] sm:$0xf]
        %v557 = vld [vmem:[#allocation3 + $0x58] sm:$0xf]
        %v558 = vld [vmem:[#allocation3 + $0x5c] sm:$0xf]
        %v559 = vld [vmem:[#allocation3 + $0x60] sm:$0xf]
        %v560 = vld [vmem:[#allocation3 + $0x64] sm:$0xf]
        %v561 = vld [vmem:[#allocation3 + $0x68] sm:$0xf]
        %v562 = vld [vmem:[#allocation3 + $0x6c] sm:$0xf]
        %v563 = vld [vmem:[#allocation3 + $0x70] sm:$0xf]
        %v564 = vld [vmem:[#allocation3 + $0x74] sm:$0xf]
        %v565 = vld [vmem:[#allocation3 + $0x78] sm:$0xf]
        %v566 = vld [vmem:[#allocation3 + $0x7c] sm:$0xf]
        %v575 = vunpack.c.l.b16 %v543
        %v576 = vunpack.c.l.b16 %v544
        %v577 = vunpack.c.l.b16 %v545
        %v578 = vunpack.c.l.b16 %v546
        %v579 = vunpack.c.l.b16 %v547
        %v580 = vunpack.c.l.b16 %v548
        %v581 = vunpack.c.l.b16 %v549
        %v582 = vunpack.c.l.b16 %v550
        %v583 = vpack.c.b16 %v576, %v575
        %v584 = vpack.c.b16 %v578, %v577
        %v585 = vpack.c.b16 %v580, %v579
        %v586 = vpack.c.b16 %v582, %v581
        %v607 = vunpack.c.l.b16 %v551
        %v608 = vunpack.c.l.b16 %v552
        %v609 = vunpack.c.l.b16 %v553
        %v610 = vunpack.c.l.b16 %v554
        %v611 = vunpack.c.l.b16 %v555
        %v612 = vunpack.c.l.b16 %v556
        %v613 = vunpack.c.l.b16 %v557
        %v614 = vunpack.c.l.b16 %v558
        %v615 = vunpack.c.l.b16 %v559
        %v616 = vunpack.c.l.b16 %v560
        %v617 = vunpack.c.l.b16 %v561
        %v618 = vunpack.c.l.b16 %v562
        %v619 = vunpack.c.l.b16 %v563
        %v620 = vunpack.c.l.b16 %v564
        %v621 = vunpack.c.l.b16 %v565
        %v622 = vunpack.c.l.b16 %v566
        %v623 = vpack.c.b16 %v608, %v607
        %v624 = vpack.c.b16 %v610, %v609
        %v625 = vpack.c.b16 %v612, %v611
        %v626 = vpack.c.b16 %v614, %v613
        %v627 = vpack.c.b16 %v616, %v615
        %v628 = vpack.c.b16 %v618, %v617
        %v629 = vpack.c.b16 %v620, %v619
        %v630 = vpack.c.b16 %v622, %v621
        %639 = vmatprep.subr.bf16.mxu0 0
        %640 = vmatpush1.bf16.msra.mxu0 %v630
        %641 = vmatprep.subr.bf16.mxu0 0
        %642 = vmatpush1.bf16.msra.mxu0 %v629
        %643 = vmatprep.subr.bf16.mxu0 0
        %644 = vmatpush1.bf16.msra.mxu0 %v628
        %645 = vmatprep.subr.bf16.mxu0 0
        %646 = vmatpush1.bf16.msra.mxu0 %v627
        %647 = vmatprep.subr.bf16.mxu0 0
        %648 = vmatpush1.bf16.msra.mxu0 %v626
        %649 = vmatprep.subr.bf16.mxu0 0
        %650 = vmatpush1.bf16.msra.mxu0 %v625
        %651 = vmatprep.subr.bf16.mxu0 0
        %652 = vmatpush1.bf16.msra.mxu0 %v624
        %653 = vmatprep.subr.bf16.mxu0 0
        %654 = vmatpush1.bf16.msra.mxu0 %v623
        %655 = vmatprep.subr.bf16.mxu0 0
        %656 = vmatpush2.bf16.msra.mxu0 0
        %657 = vmatprep.subr.bf16.mxu0 0
        %658 = vmatpush2.bf16.msra.mxu0 0
        %659 = vmatprep.subr.bf16.mxu0 0
        %660 = vmatpush2.bf16.msra.mxu0 0
        %661 = vmatprep.subr.bf16.mxu0 0
        %662 = vmatpush2.bf16.msra.mxu0 0
        %663 = vmatprep.subr.bf16.mxu0 0
        %664 = vmatpush2.bf16.msra.mxu0 0
        %665 = vmatprep.subr.bf16.mxu0 0
        %666 = vmatpush2.bf16.msra.mxu0 0
        %667 = vmatprep.subr.bf16.mxu0 0
        %668 = vmatpush2.bf16.msra.mxu0 0
        %669 = vmatprep.subr.bf16.mxu0 0
        %670 = vmatpush2.bf16.msra.mxu0 0
        %671 = vmatprep.mubr.bf16.mxu0 0
        %672 = vmatmul.mubr.bf16.gmra.mxu0 %v583
        %v673 = vpop.f32.mrf.mxu0
        %v674 = vadd.f32 0.0, %v673
        %v675 = vpop.f32.mrf.mxu0
        %v676 = vpop.f32.mrf.mxu0
        %v677 = vadd.f32 0.0, %v676
        %v678 = vpop.f32.mrf.mxu0
        %679 = vmatprep.mubr.bf16.mxu0 0
        %680 = vmatmul.mubr.bf16.gmra.mxu0 %v584
        %v681 = vpop.f32.mrf.mxu0
        %v682 = vadd.f32 0.0, %v681
        %v683 = vpop.f32.mrf.mxu0
        %v684 = vpop.f32.mrf.mxu0
        %v685 = vadd.f32 0.0, %v684
        %v686 = vpop.f32.mrf.mxu0
        %687 = vmatprep.mubr.bf16.mxu0 0
        %688 = vmatmul.mubr.bf16.gmra.mxu0 %v585
        %v689 = vpop.f32.mrf.mxu0
        %v690 = vadd.f32 0.0, %v689
        %v691 = vpop.f32.mrf.mxu0
        %v692 = vpop.f32.mrf.mxu0
        %v693 = vadd.f32 0.0, %v692
        %v694 = vpop.f32.mrf.mxu0
        %695 = vmatprep.mubr.bf16.mxu0 0
        %696 = vmatmul.mubr.bf16.gmra.mxu0 %v586
        %v697 = vpop.f32.mrf.mxu0
        %v698 = vadd.f32 0.0, %v697
        %v699 = vpop.f32.mrf.mxu0
        %v700 = vpop.f32.mrf.mxu0
        %v701 = vadd.f32 0.0, %v700
        %v702 = vpop.f32.mrf.mxu0
        %703 = vdwg.mxu0
        %v712 = vunpack.c.l.b16 %v511
        %v713 = vunpack.c.l.b16 %v512
        %v714 = vunpack.c.l.b16 %v513
        %v715 = vunpack.c.l.b16 %v514
        %v716 = vunpack.c.l.b16 %v515
        %v717 = vunpack.c.l.b16 %v516
        %v718 = vunpack.c.l.b16 %v517
        %v719 = vunpack.c.l.b16 %v518
        %v720 = vpack.c.b16 %v713, %v712
        %v721 = vpack.c.b16 %v715, %v714
        %v722 = vpack.c.b16 %v717, %v716
        %v723 = vpack.c.b16 %v719, %v718
        %v744 = vunpack.c.l.b16 %v519
        %v745 = vunpack.c.l.b16 %v520
        %v746 = vunpack.c.l.b16 %v521
        %v747 = vunpack.c.l.b16 %v522
        %v748 = vunpack.c.l.b16 %v523
        %v749 = vunpack.c.l.b16 %v524
        %v750 = vunpack.c.l.b16 %v525
        %v751 = vunpack.c.l.b16 %v526
        %v752 = vunpack.c.l.b16 %v527
        %v753 = vunpack.c.l.b16 %v528
        %v754 = vunpack.c.l.b16 %v529
        %v755 = vunpack.c.l.b16 %v530
        %v756 = vunpack.c.l.b16 %v531
        %v757 = vunpack.c.l.b16 %v532
        %v758 = vunpack.c.l.b16 %v533
        %v759 = vunpack.c.l.b16 %v534
        %v760 = vpack.c.b16 %v745, %v744
        %v761 = vpack.c.b16 %v747, %v746
        %v762 = vpack.c.b16 %v749, %v748
        %v763 = vpack.c.b16 %v751, %v750
        %v764 = vpack.c.b16 %v753, %v752
        %v765 = vpack.c.b16 %v755, %v754
        %v766 = vpack.c.b16 %v757, %v756
        %v767 = vpack.c.b16 %v759, %v758
        %776 = vmatprep.subr.bf16.mxu0 0
        %777 = vmatpush1.bf16.msra.mxu0 %v767
        %778 = vmatprep.subr.bf16.mxu0 0
        %779 = vmatpush1.bf16.msra.mxu0 %v766
        %780 = vmatprep.subr.bf16.mxu0 0
        %781 = vmatpush1.bf16.msra.mxu0 %v765
        %782 = vmatprep.subr.bf16.mxu0 0
        %783 = vmatpush1.bf16.msra.mxu0 %v764
        %784 = vmatprep.subr.bf16.mxu0 0
        %785 = vmatpush1.bf16.msra.mxu0 %v763
        %786 = vmatprep.subr.bf16.mxu0 0
        %787 = vmatpush1.bf16.msra.mxu0 %v762
        %788 = vmatprep.subr.bf16.mxu0 0
        %789 = vmatpush1.bf16.msra.mxu0 %v761
        %790 = vmatprep.subr.bf16.mxu0 0
        %791 = vmatpush1.bf16.msra.mxu0 %v760
        %792 = vmatprep.subr.bf16.mxu0 0
        %793 = vmatpush2.bf16.msra.mxu0 0
        %794 = vmatprep.subr.bf16.mxu0 0
        %795 = vmatpush2.bf16.msra.mxu0 0
        %796 = vmatprep.subr.bf16.mxu0 0
        %797 = vmatpush2.bf16.msra.mxu0 0
        %798 = vmatprep.subr.bf16.mxu0 0
        %799 = vmatpush2.bf16.msra.mxu0 0
        %800 = vmatprep.subr.bf16.mxu0 0
        %801 = vmatpush2.bf16.msra.mxu0 0
        %802 = vmatprep.subr.bf16.mxu0 0
        %803 = vmatpush2.bf16.msra.mxu0 0
        %804 = vmatprep.subr.bf16.mxu0 0
        %805 = vmatpush2.bf16.msra.mxu0 0
        %806 = vmatprep.subr.bf16.mxu0 0
        %807 = vmatpush2.bf16.msra.mxu0 0
        %808 = vmatprep.mubr.bf16.mxu0 0
        %809 = vmatmul.mubr.bf16.gmra.mxu0 %v720
        %v810 = vpop.f32.mrf.mxu0
        %v811 = vadd.f32 %v674, %v810
        %v812 = vpop.f32.mrf.mxu0
        %v813 = vpop.f32.mrf.mxu0
        %v814 = vadd.f32 %v677, %v813
        %v815 = vpop.f32.mrf.mxu0
        %816 = vmatprep.mubr.bf16.mxu0 0
        %817 = vmatmul.mubr.bf16.gmra.mxu0 %v721
        %v818 = vpop.f32.mrf.mxu0
        %v819 = vadd.f32 %v682, %v818
        %v820 = vpop.f32.mrf.mxu0
        %v821 = vpop.f32.mrf.mxu0
        %v822 = vadd.f32 %v685, %v821
        %v823 = vpop.f32.mrf.mxu0
        %824 = vmatprep.mubr.bf16.mxu0 0
        %825 = vmatmul.mubr.bf16.gmra.mxu0 %v722
        %v826 = vpop.f32.mrf.mxu0
        %v827 = vadd.f32 %v690, %v826
        %v828 = vpop.f32.mrf.mxu0
        %v829 = vpop.f32.mrf.mxu0
        %v830 = vadd.f32 %v693, %v829
        %v831 = vpop.f32.mrf.mxu0
        %832 = vmatprep.mubr.bf16.mxu0 0
        %833 = vmatmul.mubr.bf16.gmra.mxu0 %v723
        %v834 = vpop.f32.mrf.mxu0
        %v835 = vadd.f32 %v698, %v834
        %v836 = vpop.f32.mrf.mxu0
        %v837 = vpop.f32.mrf.mxu0
        %v838 = vadd.f32 %v701, %v837
        %v839 = vpop.f32.mrf.mxu0
        %840 = vdwg.mxu0
        %v841 = vld [vmem:[#allocation2 + $0x2] sm:$0xff]
        %v842 = vld [vmem:[#allocation2 + $0x12] sm:$0xff]
        %v843 = vld [vmem:[#allocation2 + $0x22] sm:$0xff]
        %v844 = vld [vmem:[#allocation2 + $0x32] sm:$0xff]
        %v845 = vld [vmem:[#allocation2 + $0x42] sm:$0xff]
        %v846 = vld [vmem:[#allocation2 + $0x52] sm:$0xff]
        %v847 = vld [vmem:[#allocation2 + $0x62] sm:$0xff]
        %v848 = vld [vmem:[#allocation2 + $0x72] sm:$0xff]
        %v849 = vpack.c.bf16 %v841, %v841
        %v850 = vpack.c.bf16 %v842, %v842
        %v851 = vpack.c.bf16 %v843, %v843
        %v852 = vpack.c.bf16 %v844, %v844
        %v853 = vpack.c.bf16 %v845, %v845
        %v854 = vpack.c.bf16 %v846, %v846
        %v855 = vpack.c.bf16 %v847, %v847
        %v856 = vpack.c.bf16 %v848, %v848
        %v857 = vld [vmem:[#allocation3 + $0x80] sm:$0xf]
        %v858 = vld [vmem:[#allocation3 + $0x84] sm:$0xf]
        %v859 = vld [vmem:[#allocation3 + $0x88] sm:$0xf]
        %v860 = vld [vmem:[#allocation3 + $0x8c] sm:$0xf]
        %v861 = vld [vmem:[#allocation3 + $0x90] sm:$0xf]
        %v862 = vld [vmem:[#allocation3 + $0x94] sm:$0xf]
        %v863 = vld [vmem:[#allocation3 + $0x98] sm:$0xf]
        %v864 = vld [vmem:[#allocation3 + $0x9c] sm:$0xf]
        %v865 = vld [vmem:[#allocation3 + $0xa0] sm:$0xf]
        %v866 = vld [vmem:[#allocation3 + $0xa4] sm:$0xf]
        %v867 = vld [vmem:[#allocation3 + $0xa8] sm:$0xf]
        %v868 = vld [vmem:[#allocation3 + $0xac] sm:$0xf]
        %v869 = vld [vmem:[#allocation3 + $0xb0] sm:$0xf]
        %v870 = vld [vmem:[#allocation3 + $0xb4] sm:$0xf]
        %v871 = vld [vmem:[#allocation3 + $0xb8] sm:$0xf]
        %v872 = vld [vmem:[#allocation3 + $0xbc] sm:$0xf]
        %v881 = vunpack.c.l.b16 %v849
        %v882 = vunpack.c.l.b16 %v850
        %v883 = vunpack.c.l.b16 %v851
        %v884 = vunpack.c.l.b16 %v852
        %v885 = vunpack.c.l.b16 %v853
        %v886 = vunpack.c.l.b16 %v854
        %v887 = vunpack.c.l.b16 %v855
        %v888 = vunpack.c.l.b16 %v856
        %v889 = vpack.c.b16 %v882, %v881
        %v890 = vpack.c.b16 %v884, %v883
        %v891 = vpack.c.b16 %v886, %v885
        %v892 = vpack.c.b16 %v888, %v887
        %v913 = vunpack.c.l.b16 %v857
        %v914 = vunpack.c.l.b16 %v858
        %v915 = vunpack.c.l.b16 %v859
        %v916 = vunpack.c.l.b16 %v860
        %v917 = vunpack.c.l.b16 %v861
        %v918 = vunpack.c.l.b16 %v862
        %v919 = vunpack.c.l.b16 %v863
        %v920 = vunpack.c.l.b16 %v864
        %v921 = vunpack.c.l.b16 %v865
        %v922 = vunpack.c.l.b16 %v866
        %v923 = vunpack.c.l.b16 %v867
        %v924 = vunpack.c.l.b16 %v868
        %v925 = vunpack.c.l.b16 %v869
        %v926 = vunpack.c.l.b16 %v870
        %v927 = vunpack.c.l.b16 %v871
        %v928 = vunpack.c.l.b16 %v872
        %v929 = vpack.c.b16 %v914, %v913
        %v930 = vpack.c.b16 %v916, %v915
        %v931 = vpack.c.b16 %v918, %v917
        %v932 = vpack.c.b16 %v920, %v919
        %v933 = vpack.c.b16 %v922, %v921
        %v934 = vpack.c.b16 %v924, %v923
        %v935 = vpack.c.b16 %v926, %v925
        %v936 = vpack.c.b16 %v928, %v927
        %945 = vmatprep.subr.bf16.mxu0 0
        %946 = vmatpush1.bf16.msra.mxu0 %v936
        %947 = vmatprep.subr.bf16.mxu0 0
        %948 = vmatpush1.bf16.msra.mxu0 %v935
        %949 = vmatprep.subr.bf16.mxu0 0
        %950 = vmatpush1.bf16.msra.mxu0 %v934
        %951 = vmatprep.subr.bf16.mxu0 0
        %952 = vmatpush1.bf16.msra.mxu0 %v933
        %953 = vmatprep.subr.bf16.mxu0 0
        %954 = vmatpush1.bf16.msra.mxu0 %v932
        %955 = vmatprep.subr.bf16.mxu0 0
        %956 = vmatpush1.bf16.msra.mxu0 %v931
        %957 = vmatprep.subr.bf16.mxu0 0
        %958 = vmatpush1.bf16.msra.mxu0 %v930
        %959 = vmatprep.subr.bf16.mxu0 0
        %960 = vmatpush1.bf16.msra.mxu0 %v929
        %961 = vmatprep.subr.bf16.mxu0 0
        %962 = vmatpush2.bf16.msra.mxu0 0
        %963 = vmatprep.subr.bf16.mxu0 0
        %964 = vmatpush2.bf16.msra.mxu0 0
        %965 = vmatprep.subr.bf16.mxu0 0
        %966 = vmatpush2.bf16.msra.mxu0 0
        %967 = vmatprep.subr.bf16.mxu0 0
        %968 = vmatpush2.bf16.msra.mxu0 0
        %969 = vmatprep.subr.bf16.mxu0 0
        %970 = vmatpush2.bf16.msra.mxu0 0
        %971 = vmatprep.subr.bf16.mxu0 0
        %972 = vmatpush2.bf16.msra.mxu0 0
        %973 = vmatprep.subr.bf16.mxu0 0
        %974 = vmatpush2.bf16.msra.mxu0 0
        %975 = vmatprep.subr.bf16.mxu0 0
        %976 = vmatpush2.bf16.msra.mxu0 0
        %977 = vmatprep.mubr.bf16.mxu0 0
        %978 = vmatmul.mubr.bf16.gmra.mxu0 %v889
        %v979 = vpop.f32.mrf.mxu0
        %v980 = vadd.f32 0.0, %v979
        %v981 = vpop.f32.mrf.mxu0
        %v982 = vpop.f32.mrf.mxu0
        %v983 = vadd.f32 0.0, %v982
        %v984 = vpop.f32.mrf.mxu0
        %985 = vmatprep.mubr.bf16.mxu0 0
        %986 = vmatmul.mubr.bf16.gmra.mxu0 %v890
        %v987 = vpop.f32.mrf.mxu0
        %v988 = vadd.f32 0.0, %v987
        %v989 = vpop.f32.mrf.mxu0
        %v990 = vpop.f32.mrf.mxu0
        %v991 = vadd.f32 0.0, %v990
        %v992 = vpop.f32.mrf.mxu0
        %993 = vmatprep.mubr.bf16.mxu0 0
        %994 = vmatmul.mubr.bf16.gmra.mxu0 %v891
        %v995 = vpop.f32.mrf.mxu0
        %v996 = vadd.f32 0.0, %v995
        %v997 = vpop.f32.mrf.mxu0
        %v998 = vpop.f32.mrf.mxu0
        %v999 = vadd.f32 0.0, %v998
        %v1000 = vpop.f32.mrf.mxu0
        %1001 = vmatprep.mubr.bf16.mxu0 0
        %1002 = vmatmul.mubr.bf16.gmra.mxu0 %v892
        %v1003 = vpop.f32.mrf.mxu0
        %v1004 = vadd.f32 0.0, %v1003
        %v1005 = vpop.f32.mrf.mxu0
        %v1006 = vpop.f32.mrf.mxu0
        %v1007 = vadd.f32 0.0, %v1006
        %v1008 = vpop.f32.mrf.mxu0
        %1009 = vdwg.mxu0
        %v1010 = vadd.f32 %v811, %v980
        %v1011 = vadd.f32 %v814, %v983
        %v1012 = vadd.f32 %v819, %v988
        %v1013 = vadd.f32 %v822, %v991
        %v1014 = vadd.f32 %v827, %v996
        %v1015 = vadd.f32 %v830, %v999
        %v1016 = vadd.f32 %v835, %v1004
        %v1017 = vadd.f32 %v838, %v1007
        %v1018 = vld [vmem:[%s494] sm:$0xff]
        %v1019 = vld [vmem:[%s494 + $0x10] sm:$0xff]
        %v1020 = vld [vmem:[%s494 + $0x20] sm:$0xff]
        %v1021 = vld [vmem:[%s494 + $0x30] sm:$0xff]
        %v1022 = vld [vmem:[%s494 + $0x40] sm:$0xff]
        %v1023 = vld [vmem:[%s494 + $0x50] sm:$0xff]
        %v1024 = vld [vmem:[%s494 + $0x60] sm:$0xff]
        %v1025 = vld [vmem:[%s494 + $0x70] sm:$0xff]
        %v1026 = vpack.c.bf16 %v1018, %v1018
        %v1027 = vpack.c.bf16 %v1019, %v1019
        %v1028 = vpack.c.bf16 %v1020, %v1020
        %v1029 = vpack.c.bf16 %v1021, %v1021
        %v1030 = vpack.c.bf16 %v1022, %v1022
        %v1031 = vpack.c.bf16 %v1023, %v1023
        %v1032 = vpack.c.bf16 %v1024, %v1024
        %v1033 = vpack.c.bf16 %v1025, %v1025
        %v1034 = vld [vmem:[#allocation3 + $0xc0] sm:$0xf]
        %v1035 = vld [vmem:[#allocation3 + $0xc4] sm:$0xf]
        %v1036 = vld [vmem:[#allocation3 + $0xc8] sm:$0xf]
        %v1037 = vld [vmem:[#allocation3 + $0xcc] sm:$0xf]
        %v1038 = vld [vmem:[#allocation3 + $0xd0] sm:$0xf]
        %v1039 = vld [vmem:[#allocation3 + $0xd4] sm:$0xf]
        %v1040 = vld [vmem:[#allocation3 + $0xd8] sm:$0xf]
        %v1041 = vld [vmem:[#allocation3 + $0xdc] sm:$0xf]
        %v1042 = vld [vmem:[#allocation3 + $0xe0] sm:$0xf]
        %v1043 = vld [vmem:[#allocation3 + $0xe4] sm:$0xf]
        %v1044 = vld [vmem:[#allocation3 + $0xe8] sm:$0xf]
        %v1045 = vld [vmem:[#allocation3 + $0xec] sm:$0xf]
        %v1046 = vld [vmem:[#allocation3 + $0xf0] sm:$0xf]
        %v1047 = vld [vmem:[#allocation3 + $0xf4] sm:$0xf]
        %v1048 = vld [vmem:[#allocation3 + $0xf8] sm:$0xf]
        %v1049 = vld [vmem:[#allocation3 + $0xfc] sm:$0xf]
        %v1058 = vunpack.c.l.b16 %v1026
        %v1059 = vunpack.c.l.b16 %v1027
        %v1060 = vunpack.c.l.b16 %v1028
        %v1061 = vunpack.c.l.b16 %v1029
        %v1062 = vunpack.c.l.b16 %v1030
        %v1063 = vunpack.c.l.b16 %v1031
        %v1064 = vunpack.c.l.b16 %v1032
        %v1065 = vunpack.c.l.b16 %v1033
        %v1066 = vpack.c.b16 %v1059, %v1058
        %v1067 = vpack.c.b16 %v1061, %v1060
        %v1068 = vpack.c.b16 %v1063, %v1062
        %v1069 = vpack.c.b16 %v1065, %v1064
        %v1090 = vunpack.c.l.b16 %v1034
        %v1091 = vunpack.c.l.b16 %v1035
        %v1092 = vunpack.c.l.b16 %v1036
        %v1093 = vunpack.c.l.b16 %v1037
        %v1094 = vunpack.c.l.b16 %v1038
        %v1095 = vunpack.c.l.b16 %v1039
        %v1096 = vunpack.c.l.b16 %v1040
        %v1097 = vunpack.c.l.b16 %v1041
        %v1098 = vunpack.c.l.b16 %v1042
        %v1099 = vunpack.c.l.b16 %v1043
        %v1100 = vunpack.c.l.b16 %v1044
        %v1101 = vunpack.c.l.b16 %v1045
        %v1102 = vunpack.c.l.b16 %v1046
        %v1103 = vunpack.c.l.b16 %v1047
        %v1104 = vunpack.c.l.b16 %v1048
        %v1105 = vunpack.c.l.b16 %v1049
        %v1106 = vpack.c.b16 %v1091, %v1090
        %v1107 = vpack.c.b16 %v1093, %v1092
        %v1108 = vpack.c.b16 %v1095, %v1094
        %v1109 = vpack.c.b16 %v1097, %v1096
        %v1110 = vpack.c.b16 %v1099, %v1098
        %v1111 = vpack.c.b16 %v1101, %v1100
        %v1112 = vpack.c.b16 %v1103, %v1102
        %v1113 = vpack.c.b16 %v1105, %v1104
        %1122 = vmatprep.subr.bf16.mxu0 0
        %1123 = vmatpush1.bf16.msra.mxu0 %v1113
        %1124 = vmatprep.subr.bf16.mxu0 0
        %1125 = vmatpush1.bf16.msra.mxu0 %v1112
        %1126 = vmatprep.subr.bf16.mxu0 0
        %1127 = vmatpush1.bf16.msra.mxu0 %v1111
        %1128 = vmatprep.subr.bf16.mxu0 0
        %1129 = vmatpush1.bf16.msra.mxu0 %v1110
        %1130 = vmatprep.subr.bf16.mxu0 0
        %1131 = vmatpush1.bf16.msra.mxu0 %v1109
        %1132 = vmatprep.subr.bf16.mxu0 0
        %1133 = vmatpush1.bf16.msra.mxu0 %v1108
        %1134 = vmatprep.subr.bf16.mxu0 0
        %1135 = vmatpush1.bf16.msra.mxu0 %v1107
        %1136 = vmatprep.subr.bf16.mxu0 0
        %1137 = vmatpush1.bf16.msra.mxu0 %v1106
        %1138 = vmatprep.subr.bf16.mxu0 0
        %1139 = vmatpush2.bf16.msra.mxu0 0
        %1140 = vmatprep.subr.bf16.mxu0 0
        %1141 = vmatpush2.bf16.msra.mxu0 0
        %1142 = vmatprep.subr.bf16.mxu0 0
        %1143 = vmatpush2.bf16.msra.mxu0 0
        %1144 = vmatprep.subr.bf16.mxu0 0
        %1145 = vmatpush2.bf16.msra.mxu0 0
        %1146 = vmatprep.subr.bf16.mxu0 0
        %1147 = vmatpush2.bf16.msra.mxu0 0
        %1148 = vmatprep.subr.bf16.mxu0 0
        %1149 = vmatpush2.bf16.msra.mxu0 0
        %1150 = vmatprep.subr.bf16.mxu0 0
        %1151 = vmatpush2.bf16.msra.mxu0 0
        %1152 = vmatprep.subr.bf16.mxu0 0
        %1153 = vmatpush2.bf16.msra.mxu0 0
        %1154 = vmatprep.mubr.bf16.mxu0 0
        %1155 = vmatmul.mubr.bf16.gmra.mxu0 %v1066
        %v1156 = vpop.f32.mrf.mxu0
        %v1157 = vadd.f32 0.0, %v1156
        %v1158 = vpop.f32.mrf.mxu0
        %v1159 = vpop.f32.mrf.mxu0
        %v1160 = vadd.f32 0.0, %v1159
        %v1161 = vpop.f32.mrf.mxu0
        %1162 = vmatprep.mubr.bf16.mxu0 0
        %1163 = vmatmul.mubr.bf16.gmra.mxu0 %v1067
        %v1164 = vpop.f32.mrf.mxu0
        %v1165 = vadd.f32 0.0, %v1164
        %v1166 = vpop.f32.mrf.mxu0
        %v1167 = vpop.f32.mrf.mxu0
        %v1168 = vadd.f32 0.0, %v1167
        %v1169 = vpop.f32.mrf.mxu0
        %1170 = vmatprep.mubr.bf16.mxu0 0
        %1171 = vmatmul.mubr.bf16.gmra.mxu0 %v1068
        %v1172 = vpop.f32.mrf.mxu0
        %v1173 = vadd.f32 0.0, %v1172
        %v1174 = vpop.f32.mrf.mxu0
        %v1175 = vpop.f32.mrf.mxu0
        %v1176 = vadd.f32 0.0, %v1175
        %v1177 = vpop.f32.mrf.mxu0
        %1178 = vmatprep.mubr.bf16.mxu0 0
        %1179 = vmatmul.mubr.bf16.gmra.mxu0 %v1069
        %v1180 = vpop.f32.mrf.mxu0
        %v1181 = vadd.f32 0.0, %v1180
        %v1182 = vpop.f32.mrf.mxu0
        %v1183 = vpop.f32.mrf.mxu0
        %v1184 = vadd.f32 0.0, %v1183
        %v1185 = vpop.f32.mrf.mxu0
        %1186 = vdwg.mxu0
        %v1187 = vadd.f32 %v1010, %v1157
        %v1188 = vadd.f32 %v1011, %v1160
        %v1189 = vadd.f32 %v1012, %v1165
        %v1190 = vadd.f32 %v1013, %v1168
        %v1191 = vadd.f32 %v1014, %v1173
        %v1192 = vadd.f32 %v1015, %v1176
        %v1193 = vadd.f32 %v1016, %v1181
        %v1194 = vadd.f32 %v1017, %v1184
        %v1195 = vld [vmem:[%s494 + $0x1] sm:$0xff]
        %v1196 = vld [vmem:[%s494 + $0x11] sm:$0xff]
        %v1197 = vld [vmem:[%s494 + $0x21] sm:$0xff]
        %v1198 = vld [vmem:[%s494 + $0x31] sm:$0xff]
        %v1199 = vld [vmem:[%s494 + $0x41] sm:$0xff]
        %v1200 = vld [vmem:[%s494 + $0x51] sm:$0xff]
        %v1201 = vld [vmem:[%s494 + $0x61] sm:$0xff]
        %v1202 = vld [vmem:[%s494 + $0x71] sm:$0xff]
        %v1203 = vpack.c.bf16 %v1195, %v1195
        %v1204 = vpack.c.bf16 %v1196, %v1196
        %v1205 = vpack.c.bf16 %v1197, %v1197
        %v1206 = vpack.c.bf16 %v1198, %v1198
        %v1207 = vpack.c.bf16 %v1199, %v1199
        %v1208 = vpack.c.bf16 %v1200, %v1200
        %v1209 = vpack.c.bf16 %v1201, %v1201
        %v1210 = vpack.c.bf16 %v1202, %v1202
        %v1211 = vld [vmem:[#allocation3 + $0x100] sm:$0xf]
        %v1212 = vld [vmem:[#allocation3 + $0x104] sm:$0xf]
        %v1213 = vld [vmem:[#allocation3 + $0x108] sm:$0xf]
        %v1214 = vld [vmem:[#allocation3 + $0x10c] sm:$0xf]
        %v1215 = vld [vmem:[#allocation3 + $0x110] sm:$0xf]
        %v1216 = vld [vmem:[#allocation3 + $0x114] sm:$0xf]
        %v1217 = vld [vmem:[#allocation3 + $0x118] sm:$0xf]
        %v1218 = vld [vmem:[#allocation3 + $0x11c] sm:$0xf]
        %v1219 = vld [vmem:[#allocation3 + $0x120] sm:$0xf]
        %v1220 = vld [vmem:[#allocation3 + $0x124] sm:$0xf]
        %v1221 = vld [vmem:[#allocation3 + $0x128] sm:$0xf]
        %v1222 = vld [vmem:[#allocation3 + $0x12c] sm:$0xf]
        %v1223 = vld [vmem:[#allocation3 + $0x130] sm:$0xf]
        %v1224 = vld [vmem:[#allocation3 + $0x134] sm:$0xf]
        %v1225 = vld [vmem:[#allocation3 + $0x138] sm:$0xf]
        %v1226 = vld [vmem:[#allocation3 + $0x13c] sm:$0xf]
        %v1235 = vunpack.c.l.b16 %v1203
        %v1236 = vunpack.c.l.b16 %v1204
        %v1237 = vunpack.c.l.b16 %v1205
        %v1238 = vunpack.c.l.b16 %v1206
        %v1239 = vunpack.c.l.b16 %v1207
        %v1240 = vunpack.c.l.b16 %v1208
        %v1241 = vunpack.c.l.b16 %v1209
        %v1242 = vunpack.c.l.b16 %v1210
        %v1243 = vpack.c.b16 %v1236, %v1235
        %v1244 = vpack.c.b16 %v1238, %v1237
        %v1245 = vpack.c.b16 %v1240, %v1239
        %v1246 = vpack.c.b16 %v1242, %v1241
        %v1267 = vunpack.c.l.b16 %v1211
        %v1268 = vunpack.c.l.b16 %v1212
        %v1269 = vunpack.c.l.b16 %v1213
        %v1270 = vunpack.c.l.b16 %v1214
        %v1271 = vunpack.c.l.b16 %v1215
        %v1272 = vunpack.c.l.b16 %v1216
        %v1273 = vunpack.c.l.b16 %v1217
        %v1274 = vunpack.c.l.b16 %v1218
        %v1275 = vunpack.c.l.b16 %v1219
        %v1276 = vunpack.c.l.b16 %v1220
        %v1277 = vunpack.c.l.b16 %v1221
        %v1278 = vunpack.c.l.b16 %v1222
        %v1279 = vunpack.c.l.b16 %v1223
        %v1280 = vunpack.c.l.b16 %v1224
        %v1281 = vunpack.c.l.b16 %v1225
        %v1282 = vunpack.c.l.b16 %v1226
        %v1283 = vpack.c.b16 %v1268, %v1267
        %v1284 = vpack.c.b16 %v1270, %v1269
        %v1285 = vpack.c.b16 %v1272, %v1271
        %v1286 = vpack.c.b16 %v1274, %v1273
        %v1287 = vpack.c.b16 %v1276, %v1275
        %v1288 = vpack.c.b16 %v1278, %v1277
        %v1289 = vpack.c.b16 %v1280, %v1279
        %v1290 = vpack.c.b16 %v1282, %v1281
        %1299 = vmatprep.subr.bf16.mxu0 0
        %1300 = vmatpush1.bf16.msra.mxu0 %v1290
        %1301 = vmatprep.subr.bf16.mxu0 0
        %1302 = vmatpush1.bf16.msra.mxu0 %v1289
        %1303 = vmatprep.subr.bf16.mxu0 0
        %1304 = vmatpush1.bf16.msra.mxu0 %v1288
        %1305 = vmatprep.subr.bf16.mxu0 0
        %1306 = vmatpush1.bf16.msra.mxu0 %v1287
        %1307 = vmatprep.subr.bf16.mxu0 0
        %1308 = vmatpush1.bf16.msra.mxu0 %v1286
        %1309 = vmatprep.subr.bf16.mxu0 0
        %1310 = vmatpush1.bf16.msra.mxu0 %v1285
        %1311 = vmatprep.subr.bf16.mxu0 0
        %1312 = vmatpush1.bf16.msra.mxu0 %v1284
        %1313 = vmatprep.subr.bf16.mxu0 0
        %1314 = vmatpush1.bf16.msra.mxu0 %v1283
        %1315 = vmatprep.subr.bf16.mxu0 0
        %1316 = vmatpush2.bf16.msra.mxu0 0
        %1317 = vmatprep.subr.bf16.mxu0 0
        %1318 = vmatpush2.bf16.msra.mxu0 0
        %1319 = vmatprep.subr.bf16.mxu0 0
        %1320 = vmatpush2.bf16.msra.mxu0 0
        %1321 = vmatprep.subr.bf16.mxu0 0
        %1322 = vmatpush2.bf16.msra.mxu0 0
        %1323 = vmatprep.subr.bf16.mxu0 0
        %1324 = vmatpush2.bf16.msra.mxu0 0
        %1325 = vmatprep.subr.bf16.mxu0 0
        %1326 = vmatpush2.bf16.msra.mxu0 0
        %1327 = vmatprep.subr.bf16.mxu0 0
        %1328 = vmatpush2.bf16.msra.mxu0 0
        %1329 = vmatprep.subr.bf16.mxu0 0
        %1330 = vmatpush2.bf16.msra.mxu0 0
        %1331 = vmatprep.mubr.bf16.mxu0 0
        %1332 = vmatmul.mubr.bf16.gmra.mxu0 %v1243
        %v1333 = vpop.f32.mrf.mxu0
        %v1334 = vadd.f32 0.0, %v1333
        %v1335 = vpop.f32.mrf.mxu0
        %v1336 = vpop.f32.mrf.mxu0
        %v1337 = vadd.f32 0.0, %v1336
        %v1338 = vpop.f32.mrf.mxu0
        %1339 = vmatprep.mubr.bf16.mxu0 0
        %1340 = vmatmul.mubr.bf16.gmra.mxu0 %v1244
        %v1341 = vpop.f32.mrf.mxu0
        %v1342 = vadd.f32 0.0, %v1341
        %v1343 = vpop.f32.mrf.mxu0
        %v1344 = vpop.f32.mrf.mxu0
        %v1345 = vadd.f32 0.0, %v1344
        %v1346 = vpop.f32.mrf.mxu0
        %1347 = vmatprep.mubr.bf16.mxu0 0
        %1348 = vmatmul.mubr.bf16.gmra.mxu0 %v1245
        %v1349 = vpop.f32.mrf.mxu0
        %v1350 = vadd.f32 0.0, %v1349
        %v1351 = vpop.f32.mrf.mxu0
        %v1352 = vpop.f32.mrf.mxu0
        %v1353 = vadd.f32 0.0, %v1352
        %v1354 = vpop.f32.mrf.mxu0
        %1355 = vmatprep.mubr.bf16.mxu0 0
        %1356 = vmatmul.mubr.bf16.gmra.mxu0 %v1246
        %v1357 = vpop.f32.mrf.mxu0
        %v1358 = vadd.f32 0.0, %v1357
        %v1359 = vpop.f32.mrf.mxu0
        %v1360 = vpop.f32.mrf.mxu0
        %v1361 = vadd.f32 0.0, %v1360
        %v1362 = vpop.f32.mrf.mxu0
        %1363 = vdwg.mxu0
        %v1364 = vadd.f32 %v1187, %v1334
        %v1365 = vadd.f32 %v1188, %v1337
        %v1366 = vadd.f32 %v1189, %v1342
        %v1367 = vadd.f32 %v1190, %v1345
        %v1368 = vadd.f32 %v1191, %v1350
        %v1369 = vadd.f32 %v1192, %v1353
        %v1370 = vadd.f32 %v1193, %v1358
        %v1371 = vadd.f32 %v1194, %v1361
        %v1372 = vld [vmem:[%s494 + $0x2] sm:$0xff]
        %v1373 = vld [vmem:[%s494 + $0x12] sm:$0xff]
        %v1374 = vld [vmem:[%s494 + $0x22] sm:$0xff]
        %v1375 = vld [vmem:[%s494 + $0x32] sm:$0xff]
        %v1376 = vld [vmem:[%s494 + $0x42] sm:$0xff]
        %v1377 = vld [vmem:[%s494 + $0x52] sm:$0xff]
        %v1378 = vld [vmem:[%s494 + $0x62] sm:$0xff]
        %v1379 = vld [vmem:[%s494 + $0x72] sm:$0xff]
        %v1380 = vpack.c.bf16 %v1372, %v1372
        %v1381 = vpack.c.bf16 %v1373, %v1373
        %v1382 = vpack.c.bf16 %v1374, %v1374
        %v1383 = vpack.c.bf16 %v1375, %v1375
        %v1384 = vpack.c.bf16 %v1376, %v1376
        %v1385 = vpack.c.bf16 %v1377, %v1377
        %v1386 = vpack.c.bf16 %v1378, %v1378
        %v1387 = vpack.c.bf16 %v1379, %v1379
        %v1388 = vld [vmem:[#allocation3 + $0x140] sm:$0xf]
        %v1389 = vld [vmem:[#allocation3 + $0x144] sm:$0xf]
        %v1390 = vld [vmem:[#allocation3 + $0x148] sm:$0xf]
        %v1391 = vld [vmem:[#allocation3 + $0x14c] sm:$0xf]
        %v1392 = vld [vmem:[#allocation3 + $0x150] sm:$0xf]
        %v1393 = vld [vmem:[#allocation3 + $0x154] sm:$0xf]
        %v1394 = vld [vmem:[#allocation3 + $0x158] sm:$0xf]
        %v1395 = vld [vmem:[#allocation3 + $0x15c] sm:$0xf]
        %v1396 = vld [vmem:[#allocation3 + $0x160] sm:$0xf]
        %v1397 = vld [vmem:[#allocation3 + $0x164] sm:$0xf]
        %v1398 = vld [vmem:[#allocation3 + $0x168] sm:$0xf]
        %v1399 = vld [vmem:[#allocation3 + $0x16c] sm:$0xf]
        %v1400 = vld [vmem:[#allocation3 + $0x170] sm:$0xf]
        %v1401 = vld [vmem:[#allocation3 + $0x174] sm:$0xf]
        %v1402 = vld [vmem:[#allocation3 + $0x178] sm:$0xf]
        %v1403 = vld [vmem:[#allocation3 + $0x17c] sm:$0xf]
        %v1412 = vunpack.c.l.b16 %v1380
        %v1413 = vunpack.c.l.b16 %v1381
        %v1414 = vunpack.c.l.b16 %v1382
        %v1415 = vunpack.c.l.b16 %v1383
        %v1416 = vunpack.c.l.b16 %v1384
        %v1417 = vunpack.c.l.b16 %v1385
        %v1418 = vunpack.c.l.b16 %v1386
        %v1419 = vunpack.c.l.b16 %v1387
        %v1420 = vpack.c.b16 %v1413, %v1412
        %v1421 = vpack.c.b16 %v1415, %v1414
        %v1422 = vpack.c.b16 %v1417, %v1416
        %v1423 = vpack.c.b16 %v1419, %v1418
        %v1444 = vunpack.c.l.b16 %v1388
        %v1445 = vunpack.c.l.b16 %v1389
        %v1446 = vunpack.c.l.b16 %v1390
        %v1447 = vunpack.c.l.b16 %v1391
        %v1448 = vunpack.c.l.b16 %v1392
        %v1449 = vunpack.c.l.b16 %v1393
        %v1450 = vunpack.c.l.b16 %v1394
        %v1451 = vunpack.c.l.b16 %v1395
        %v1452 = vunpack.c.l.b16 %v1396
        %v1453 = vunpack.c.l.b16 %v1397
        %v1454 = vunpack.c.l.b16 %v1398
        %v1455 = vunpack.c.l.b16 %v1399
        %v1456 = vunpack.c.l.b16 %v1400
        %v1457 = vunpack.c.l.b16 %v1401
        %v1458 = vunpack.c.l.b16 %v1402
        %v1459 = vunpack.c.l.b16 %v1403
        %v1460 = vpack.c.b16 %v1445, %v1444
        %v1461 = vpack.c.b16 %v1447, %v1446
        %v1462 = vpack.c.b16 %v1449, %v1448
        %v1463 = vpack.c.b16 %v1451, %v1450
        %v1464 = vpack.c.b16 %v1453, %v1452
        %v1465 = vpack.c.b16 %v1455, %v1454
        %v1466 = vpack.c.b16 %v1457, %v1456
        %v1467 = vpack.c.b16 %v1459, %v1458
        %1476 = vmatprep.subr.bf16.mxu0 0
        %1477 = vmatpush1.bf16.msra.mxu0 %v1467
        %1478 = vmatprep.subr.bf16.mxu0 0
        %1479 = vmatpush1.bf16.msra.mxu0 %v1466
        %1480 = vmatprep.subr.bf16.mxu0 0
        %1481 = vmatpush1.bf16.msra.mxu0 %v1465
        %1482 = vmatprep.subr.bf16.mxu0 0
        %1483 = vmatpush1.bf16.msra.mxu0 %v1464
        %1484 = vmatprep.subr.bf16.mxu0 0
        %1485 = vmatpush1.bf16.msra.mxu0 %v1463
        %1486 = vmatprep.subr.bf16.mxu0 0
        %1487 = vmatpush1.bf16.msra.mxu0 %v1462
        %1488 = vmatprep.subr.bf16.mxu0 0
        %1489 = vmatpush1.bf16.msra.mxu0 %v1461
        %1490 = vmatprep.subr.bf16.mxu0 0
        %1491 = vmatpush1.bf16.msra.mxu0 %v1460
        %1492 = vmatprep.subr.bf16.mxu0 0
        %1493 = vmatpush2.bf16.msra.mxu0 0
        %1494 = vmatprep.subr.bf16.mxu0 0
        %1495 = vmatpush2.bf16.msra.mxu0 0
        %1496 = vmatprep.subr.bf16.mxu0 0
        %1497 = vmatpush2.bf16.msra.mxu0 0
        %1498 = vmatprep.subr.bf16.mxu0 0
        %1499 = vmatpush2.bf16.msra.mxu0 0
        %1500 = vmatprep.subr.bf16.mxu0 0
        %1501 = vmatpush2.bf16.msra.mxu0 0
        %1502 = vmatprep.subr.bf16.mxu0 0
        %1503 = vmatpush2.bf16.msra.mxu0 0
        %1504 = vmatprep.subr.bf16.mxu0 0
        %1505 = vmatpush2.bf16.msra.mxu0 0
        %1506 = vmatprep.subr.bf16.mxu0 0
        %1507 = vmatpush2.bf16.msra.mxu0 0
        %1508 = vmatprep.mubr.bf16.mxu0 0
        %1509 = vmatmul.mubr.bf16.gmra.mxu0 %v1420
        %v1510 = vpop.f32.mrf.mxu0
        %v1511 = vadd.f32 0.0, %v1510
        %v1512 = vpop.f32.mrf.mxu0
        %v1513 = vpop.f32.mrf.mxu0
        %v1514 = vadd.f32 0.0, %v1513
        %v1515 = vpop.f32.mrf.mxu0
        %1516 = vmatprep.mubr.bf16.mxu0 0
        %1517 = vmatmul.mubr.bf16.gmra.mxu0 %v1421
        %v1518 = vpop.f32.mrf.mxu0
        %v1519 = vadd.f32 0.0, %v1518
        %v1520 = vpop.f32.mrf.mxu0
        %v1521 = vpop.f32.mrf.mxu0
        %v1522 = vadd.f32 0.0, %v1521
        %v1523 = vpop.f32.mrf.mxu0
        %1524 = vmatprep.mubr.bf16.mxu0 0
        %1525 = vmatmul.mubr.bf16.gmra.mxu0 %v1422
        %v1526 = vpop.f32.mrf.mxu0
        %v1527 = vadd.f32 0.0, %v1526
        %v1528 = vpop.f32.mrf.mxu0
        %v1529 = vpop.f32.mrf.mxu0
        %v1530 = vadd.f32 0.0, %v1529
        %v1531 = vpop.f32.mrf.mxu0
        %1532 = vmatprep.mubr.bf16.mxu0 0
        %1533 = vmatmul.mubr.bf16.gmra.mxu0 %v1423
        %v1534 = vpop.f32.mrf.mxu0
        %v1535 = vadd.f32 0.0, %v1534
        %v1536 = vpop.f32.mrf.mxu0
        %v1537 = vpop.f32.mrf.mxu0
        %v1538 = vadd.f32 0.0, %v1537
        %v1539 = vpop.f32.mrf.mxu0
        %1540 = vdwg.mxu0
        %v1541 = vadd.f32 %v1364, %v1511
        %v1542 = vadd.f32 %v1365, %v1514
        %v1543 = vadd.f32 %v1366, %v1519
        %v1544 = vadd.f32 %v1367, %v1522
        %v1545 = vadd.f32 %v1368, %v1527
        %v1546 = vadd.f32 %v1369, %v1530
        %v1547 = vadd.f32 %v1370, %v1535
        %v1548 = vadd.f32 %v1371, %v1538
        %s1549 = scalar_lea.vmem [#allocation2], 32
        %v1550 = vld [vmem:[%s1549] sm:$0xff]
        %v1551 = vld [vmem:[%s1549 + $0x10] sm:$0xff]
        %v1552 = vld [vmem:[%s1549 + $0x20] sm:$0xff]
        %v1553 = vld [vmem:[%s1549 + $0x30] sm:$0xff]
        %v1554 = vld [vmem:[%s1549 + $0x40] sm:$0xff]
        %v1555 = vld [vmem:[%s1549 + $0x50] sm:$0xff]
        %v1556 = vld [vmem:[%s1549 + $0x60] sm:$0xff]
        %v1557 = vld [vmem:[%s1549 + $0x70] sm:$0xff]
        %v1558 = vpack.c.bf16 %v1550, %v1550
        %v1559 = vpack.c.bf16 %v1551, %v1551
        %v1560 = vpack.c.bf16 %v1552, %v1552
        %v1561 = vpack.c.bf16 %v1553, %v1553
        %v1562 = vpack.c.bf16 %v1554, %v1554
        %v1563 = vpack.c.bf16 %v1555, %v1555
        %v1564 = vpack.c.bf16 %v1556, %v1556
        %v1565 = vpack.c.bf16 %v1557, %v1557
        %v1566 = vld [vmem:[#allocation3 + $0x180] sm:$0xf]
        %v1567 = vld [vmem:[#allocation3 + $0x184] sm:$0xf]
        %v1568 = vld [vmem:[#allocation3 + $0x188] sm:$0xf]
        %v1569 = vld [vmem:[#allocation3 + $0x18c] sm:$0xf]
        %v1570 = vld [vmem:[#allocation3 + $0x190] sm:$0xf]
        %v1571 = vld [vmem:[#allocation3 + $0x194] sm:$0xf]
        %v1572 = vld [vmem:[#allocation3 + $0x198] sm:$0xf]
        %v1573 = vld [vmem:[#allocation3 + $0x19c] sm:$0xf]
        %v1574 = vld [vmem:[#allocation3 + $0x1a0] sm:$0xf]
        %v1575 = vld [vmem:[#allocation3 + $0x1a4] sm:$0xf]
        %v1576 = vld [vmem:[#allocation3 + $0x1a8] sm:$0xf]
        %v1577 = vld [vmem:[#allocation3 + $0x1ac] sm:$0xf]
        %v1578 = vld [vmem:[#allocation3 + $0x1b0] sm:$0xf]
        %v1579 = vld [vmem:[#allocation3 + $0x1b4] sm:$0xf]
        %v1580 = vld [vmem:[#allocation3 + $0x1b8] sm:$0xf]
        %v1581 = vld [vmem:[#allocation3 + $0x1bc] sm:$0xf]
        %v1590 = vunpack.c.l.b16 %v1558
        %v1591 = vunpack.c.l.b16 %v1559
        %v1592 = vunpack.c.l.b16 %v1560
        %v1593 = vunpack.c.l.b16 %v1561
        %v1594 = vunpack.c.l.b16 %v1562
        %v1595 = vunpack.c.l.b16 %v1563
        %v1596 = vunpack.c.l.b16 %v1564
        %v1597 = vunpack.c.l.b16 %v1565
        %v1598 = vpack.c.b16 %v1591, %v1590
        %v1599 = vpack.c.b16 %v1593, %v1592
        %v1600 = vpack.c.b16 %v1595, %v1594
        %v1601 = vpack.c.b16 %v1597, %v1596
        %v1622 = vunpack.c.l.b16 %v1566
        %v1623 = vunpack.c.l.b16 %v1567
        %v1624 = vunpack.c.l.b16 %v1568
        %v1625 = vunpack.c.l.b16 %v1569
        %v1626 = vunpack.c.l.b16 %v1570
        %v1627 = vunpack.c.l.b16 %v1571
        %v1628 = vunpack.c.l.b16 %v1572
        %v1629 = vunpack.c.l.b16 %v1573
        %v1630 = vunpack.c.l.b16 %v1574
        %v1631 = vunpack.c.l.b16 %v1575
        %v1632 = vunpack.c.l.b16 %v1576
        %v1633 = vunpack.c.l.b16 %v1577
        %v1634 = vunpack.c.l.b16 %v1578
        %v1635 = vunpack.c.l.b16 %v1579
        %v1636 = vunpack.c.l.b16 %v1580
        %v1637 = vunpack.c.l.b16 %v1581
        %v1638 = vpack.c.b16 %v1623, %v1622
        %v1639 = vpack.c.b16 %v1625, %v1624
        %v1640 = vpack.c.b16 %v1627, %v1626
        %v1641 = vpack.c.b16 %v1629, %v1628
        %v1642 = vpack.c.b16 %v1631, %v1630
        %v1643 = vpack.c.b16 %v1633, %v1632
        %v1644 = vpack.c.b16 %v1635, %v1634
        %v1645 = vpack.c.b16 %v1637, %v1636
        %1654 = vmatprep.subr.bf16.mxu0 0
        %1655 = vmatpush1.bf16.msra.mxu0 %v1645
        %1656 = vmatprep.subr.bf16.mxu0 0
        %1657 = vmatpush1.bf16.msra.mxu0 %v1644
        %1658 = vmatprep.subr.bf16.mxu0 0
        %1659 = vmatpush1.bf16.msra.mxu0 %v1643
        %1660 = vmatprep.subr.bf16.mxu0 0
        %1661 = vmatpush1.bf16.msra.mxu0 %v1642
        %1662 = vmatprep.subr.bf16.mxu0 0
        %1663 = vmatpush1.bf16.msra.mxu0 %v1641
        %1664 = vmatprep.subr.bf16.mxu0 0
        %1665 = vmatpush1.bf16.msra.mxu0 %v1640
        %1666 = vmatprep.subr.bf16.mxu0 0
        %1667 = vmatpush1.bf16.msra.mxu0 %v1639
        %1668 = vmatprep.subr.bf16.mxu0 0
        %1669 = vmatpush1.bf16.msra.mxu0 %v1638
        %1670 = vmatprep.subr.bf16.mxu0 0
        %1671 = vmatpush2.bf16.msra.mxu0 0
        %1672 = vmatprep.subr.bf16.mxu0 0
        %1673 = vmatpush2.bf16.msra.mxu0 0
        %1674 = vmatprep.subr.bf16.mxu0 0
        %1675 = vmatpush2.bf16.msra.mxu0 0
        %1676 = vmatprep.subr.bf16.mxu0 0
        %1677 = vmatpush2.bf16.msra.mxu0 0
        %1678 = vmatprep.subr.bf16.mxu0 0
        %1679 = vmatpush2.bf16.msra.mxu0 0
        %1680 = vmatprep.subr.bf16.mxu0 0
        %1681 = vmatpush2.bf16.msra.mxu0 0
        %1682 = vmatprep.subr.bf16.mxu0 0
        %1683 = vmatpush2.bf16.msra.mxu0 0
        %1684 = vmatprep.subr.bf16.mxu0 0
        %1685 = vmatpush2.bf16.msra.mxu0 0
        %1686 = vmatprep.mubr.bf16.mxu0 0
        %1687 = vmatmul.mubr.bf16.gmra.mxu0 %v1598
        %v1688 = vpop.f32.mrf.mxu0
        %v1689 = vadd.f32 0.0, %v1688
        %v1690 = vpop.f32.mrf.mxu0
        %v1691 = vpop.f32.mrf.mxu0
        %v1692 = vadd.f32 0.0, %v1691
        %v1693 = vpop.f32.mrf.mxu0
        %1694 = vmatprep.mubr.bf16.mxu0 0
        %1695 = vmatmul.mubr.bf16.gmra.mxu0 %v1599
        %v1696 = vpop.f32.mrf.mxu0
        %v1697 = vadd.f32 0.0, %v1696
        %v1698 = vpop.f32.mrf.mxu0
        %v1699 = vpop.f32.mrf.mxu0
        %v1700 = vadd.f32 0.0, %v1699
        %v1701 = vpop.f32.mrf.mxu0
        %1702 = vmatprep.mubr.bf16.mxu0 0
        %1703 = vmatmul.mubr.bf16.gmra.mxu0 %v1600
        %v1704 = vpop.f32.mrf.mxu0
        %v1705 = vadd.f32 0.0, %v1704
        %v1706 = vpop.f32.mrf.mxu0
        %v1707 = vpop.f32.mrf.mxu0
        %v1708 = vadd.f32 0.0, %v1707
        %v1709 = vpop.f32.mrf.mxu0
        %1710 = vmatprep.mubr.bf16.mxu0 0
        %1711 = vmatmul.mubr.bf16.gmra.mxu0 %v1601
        %v1712 = vpop.f32.mrf.mxu0
        %v1713 = vadd.f32 0.0, %v1712
        %v1714 = vpop.f32.mrf.mxu0
        %v1715 = vpop.f32.mrf.mxu0
        %v1716 = vadd.f32 0.0, %v1715
        %v1717 = vpop.f32.mrf.mxu0
        %1718 = vdwg.mxu0
        %v1719 = vadd.f32 %v1541, %v1689
        %v1720 = vadd.f32 %v1542, %v1692
        %v1721 = vadd.f32 %v1543, %v1697
        %v1722 = vadd.f32 %v1544, %v1700
        %v1723 = vadd.f32 %v1545, %v1705
        %v1724 = vadd.f32 %v1546, %v1708
        %v1725 = vadd.f32 %v1547, %v1713
        %v1726 = vadd.f32 %v1548, %v1716
        %v1727 = vld [vmem:[%s1549 + $0x1] sm:$0xff]
        %v1728 = vld [vmem:[%s1549 + $0x11] sm:$0xff]
        %v1729 = vld [vmem:[%s1549 + $0x21] sm:$0xff]
        %v1730 = vld [vmem:[%s1549 + $0x31] sm:$0xff]
        %v1731 = vld [vmem:[%s1549 + $0x41] sm:$0xff]
        %v1732 = vld [vmem:[%s1549 + $0x51] sm:$0xff]
        %v1733 = vld [vmem:[%s1549 + $0x61] sm:$0xff]
        %v1734 = vld [vmem:[%s1549 + $0x71] sm:$0xff]
        %v1735 = vpack.c.bf16 %v1727, %v1727
        %v1736 = vpack.c.bf16 %v1728, %v1728
        %v1737 = vpack.c.bf16 %v1729, %v1729
        %v1738 = vpack.c.bf16 %v1730, %v1730
        %v1739 = vpack.c.bf16 %v1731, %v1731
        %v1740 = vpack.c.bf16 %v1732, %v1732
        %v1741 = vpack.c.bf16 %v1733, %v1733
        %v1742 = vpack.c.bf16 %v1734, %v1734
        %v1743 = vld [vmem:[#allocation3 + $0x1c0] sm:$0xf]
        %v1744 = vld [vmem:[#allocation3 + $0x1c4] sm:$0xf]
        %v1745 = vld [vmem:[#allocation3 + $0x1c8] sm:$0xf]
        %v1746 = vld [vmem:[#allocation3 + $0x1cc] sm:$0xf]
        %v1747 = vld [vmem:[#allocation3 + $0x1d0] sm:$0xf]
        %v1748 = vld [vmem:[#allocation3 + $0x1d4] sm:$0xf]
        %v1749 = vld [vmem:[#allocation3 + $0x1d8] sm:$0xf]
        %v1750 = vld [vmem:[#allocation3 + $0x1dc] sm:$0xf]
        %v1751 = vld [vmem:[#allocation3 + $0x1e0] sm:$0xf]
        %v1752 = vld [vmem:[#allocation3 + $0x1e4] sm:$0xf]
        %v1753 = vld [vmem:[#allocation3 + $0x1e8] sm:$0xf]
        %v1754 = vld [vmem:[#allocation3 + $0x1ec] sm:$0xf]
        %v1755 = vld [vmem:[#allocation3 + $0x1f0] sm:$0xf]
        %v1756 = vld [vmem:[#allocation3 + $0x1f4] sm:$0xf]
        %v1757 = vld [vmem:[#allocation3 + $0x1f8] sm:$0xf]
        %v1758 = vld [vmem:[#allocation3 + $0x1fc] sm:$0xf]
        %v1767 = vunpack.c.l.b16 %v1735
        %v1768 = vunpack.c.l.b16 %v1736
        %v1769 = vunpack.c.l.b16 %v1737
        %v1770 = vunpack.c.l.b16 %v1738
        %v1771 = vunpack.c.l.b16 %v1739
        %v1772 = vunpack.c.l.b16 %v1740
        %v1773 = vunpack.c.l.b16 %v1741
        %v1774 = vunpack.c.l.b16 %v1742
        %v1775 = vpack.c.b16 %v1768, %v1767
        %v1776 = vpack.c.b16 %v1770, %v1769
        %v1777 = vpack.c.b16 %v1772, %v1771
        %v1778 = vpack.c.b16 %v1774, %v1773
        %v1799 = vunpack.c.l.b16 %v1743
        %v1800 = vunpack.c.l.b16 %v1744
        %v1801 = vunpack.c.l.b16 %v1745
        %v1802 = vunpack.c.l.b16 %v1746
        %v1803 = vunpack.c.l.b16 %v1747
        %v1804 = vunpack.c.l.b16 %v1748
        %v1805 = vunpack.c.l.b16 %v1749
        %v1806 = vunpack.c.l.b16 %v1750
        %v1807 = vunpack.c.l.b16 %v1751
        %v1808 = vunpack.c.l.b16 %v1752
        %v1809 = vunpack.c.l.b16 %v1753
        %v1810 = vunpack.c.l.b16 %v1754
        %v1811 = vunpack.c.l.b16 %v1755
        %v1812 = vunpack.c.l.b16 %v1756
        %v1813 = vunpack.c.l.b16 %v1757
        %v1814 = vunpack.c.l.b16 %v1758
        %v1815 = vpack.c.b16 %v1800, %v1799
        %v1816 = vpack.c.b16 %v1802, %v1801
        %v1817 = vpack.c.b16 %v1804, %v1803
        %v1818 = vpack.c.b16 %v1806, %v1805
        %v1819 = vpack.c.b16 %v1808, %v1807
        %v1820 = vpack.c.b16 %v1810, %v1809
        %v1821 = vpack.c.b16 %v1812, %v1811
        %v1822 = vpack.c.b16 %v1814, %v1813
        %1831 = vmatprep.subr.bf16.mxu0 0
        %1832 = vmatpush1.bf16.msra.mxu0 %v1822
        %1833 = vmatprep.subr.bf16.mxu0 0
        %1834 = vmatpush1.bf16.msra.mxu0 %v1821
        %1835 = vmatprep.subr.bf16.mxu0 0
        %1836 = vmatpush1.bf16.msra.mxu0 %v1820
        %1837 = vmatprep.subr.bf16.mxu0 0
        %1838 = vmatpush1.bf16.msra.mxu0 %v1819
        %1839 = vmatprep.subr.bf16.mxu0 0
        %1840 = vmatpush1.bf16.msra.mxu0 %v1818
        %1841 = vmatprep.subr.bf16.mxu0 0
        %1842 = vmatpush1.bf16.msra.mxu0 %v1817
        %1843 = vmatprep.subr.bf16.mxu0 0
        %1844 = vmatpush1.bf16.msra.mxu0 %v1816
        %1845 = vmatprep.subr.bf16.mxu0 0
        %1846 = vmatpush1.bf16.msra.mxu0 %v1815
        %1847 = vmatprep.subr.bf16.mxu0 0
        %1848 = vmatpush2.bf16.msra.mxu0 0
        %1849 = vmatprep.subr.bf16.mxu0 0
        %1850 = vmatpush2.bf16.msra.mxu0 0
        %1851 = vmatprep.subr.bf16.mxu0 0
        %1852 = vmatpush2.bf16.msra.mxu0 0
        %1853 = vmatprep.subr.bf16.mxu0 0
        %1854 = vmatpush2.bf16.msra.mxu0 0
        %1855 = vmatprep.subr.bf16.mxu0 0
        %1856 = vmatpush2.bf16.msra.mxu0 0
        %1857 = vmatprep.subr.bf16.mxu0 0
        %1858 = vmatpush2.bf16.msra.mxu0 0
        %1859 = vmatprep.subr.bf16.mxu0 0
        %1860 = vmatpush2.bf16.msra.mxu0 0
        %1861 = vmatprep.subr.bf16.mxu0 0
        %1862 = vmatpush2.bf16.msra.mxu0 0
        %1863 = vmatprep.mubr.bf16.mxu0 0
        %1864 = vmatmul.mubr.bf16.gmra.mxu0 %v1775
        %v1865 = vpop.f32.mrf.mxu0
        %v1866 = vadd.f32 0.0, %v1865
        %v1867 = vpop.f32.mrf.mxu0
        %v1868 = vpop.f32.mrf.mxu0
        %v1869 = vadd.f32 0.0, %v1868
        %v1870 = vpop.f32.mrf.mxu0
        %1871 = vmatprep.mubr.bf16.mxu0 0
        %1872 = vmatmul.mubr.bf16.gmra.mxu0 %v1776
        %v1873 = vpop.f32.mrf.mxu0
        %v1874 = vadd.f32 0.0, %v1873
        %v1875 = vpop.f32.mrf.mxu0
        %v1876 = vpop.f32.mrf.mxu0
        %v1877 = vadd.f32 0.0, %v1876
        %v1878 = vpop.f32.mrf.mxu0
        %1879 = vmatprep.mubr.bf16.mxu0 0
        %1880 = vmatmul.mubr.bf16.gmra.mxu0 %v1777
        %v1881 = vpop.f32.mrf.mxu0
        %v1882 = vadd.f32 0.0, %v1881
        %v1883 = vpop.f32.mrf.mxu0
        %v1884 = vpop.f32.mrf.mxu0
        %v1885 = vadd.f32 0.0, %v1884
        %v1886 = vpop.f32.mrf.mxu0
        %1887 = vmatprep.mubr.bf16.mxu0 0
        %1888 = vmatmul.mubr.bf16.gmra.mxu0 %v1778
        %v1889 = vpop.f32.mrf.mxu0
        %v1890 = vadd.f32 0.0, %v1889
        %v1891 = vpop.f32.mrf.mxu0
        %v1892 = vpop.f32.mrf.mxu0
        %v1893 = vadd.f32 0.0, %v1892
        %v1894 = vpop.f32.mrf.mxu0
        %1895 = vdwg.mxu0
        %v1896 = vadd.f32 %v1719, %v1866
        %v1897 = vadd.f32 %v1720, %v1869
        %v1898 = vadd.f32 %v1721, %v1874
        %v1899 = vadd.f32 %v1722, %v1877
        %v1900 = vadd.f32 %v1723, %v1882
        %v1901 = vadd.f32 %v1724, %v1885
        %v1902 = vadd.f32 %v1725, %v1890
        %v1903 = vadd.f32 %v1726, %v1893
        %v1904 = vld [vmem:[%s1549 + $0x2] sm:$0xff]
        %v1905 = vld [vmem:[%s1549 + $0x12] sm:$0xff]
        %v1906 = vld [vmem:[%s1549 + $0x22] sm:$0xff]
        %v1907 = vld [vmem:[%s1549 + $0x32] sm:$0xff]
        %v1908 = vld [vmem:[%s1549 + $0x42] sm:$0xff]
        %v1909 = vld [vmem:[%s1549 + $0x52] sm:$0xff]
        %v1910 = vld [vmem:[%s1549 + $0x62] sm:$0xff]
        %v1911 = vld [vmem:[%s1549 + $0x72] sm:$0xff]
        %v1912 = vpack.c.bf16 %v1904, %v1904
        %v1913 = vpack.c.bf16 %v1905, %v1905
        %v1914 = vpack.c.bf16 %v1906, %v1906
        %v1915 = vpack.c.bf16 %v1907, %v1907
        %v1916 = vpack.c.bf16 %v1908, %v1908
        %v1917 = vpack.c.bf16 %v1909, %v1909
        %v1918 = vpack.c.bf16 %v1910, %v1910
        %v1919 = vpack.c.bf16 %v1911, %v1911
        %v1920 = vld [vmem:[#allocation3 + $0x200] sm:$0xf]
        %v1921 = vld [vmem:[#allocation3 + $0x204] sm:$0xf]
        %v1922 = vld [vmem:[#allocation3 + $0x208] sm:$0xf]
        %v1923 = vld [vmem:[#allocation3 + $0x20c] sm:$0xf]
        %v1924 = vld [vmem:[#allocation3 + $0x210] sm:$0xf]
        %v1925 = vld [vmem:[#allocation3 + $0x214] sm:$0xf]
        %v1926 = vld [vmem:[#allocation3 + $0x218] sm:$0xf]
        %v1927 = vld [vmem:[#allocation3 + $0x21c] sm:$0xf]
        %v1928 = vld [vmem:[#allocation3 + $0x220] sm:$0xf]
        %v1929 = vld [vmem:[#allocation3 + $0x224] sm:$0xf]
        %v1930 = vld [vmem:[#allocation3 + $0x228] sm:$0xf]
        %v1931 = vld [vmem:[#allocation3 + $0x22c] sm:$0xf]
        %v1932 = vld [vmem:[#allocation3 + $0x230] sm:$0xf]
        %v1933 = vld [vmem:[#allocation3 + $0x234] sm:$0xf]
        %v1934 = vld [vmem:[#allocation3 + $0x238] sm:$0xf]
        %v1935 = vld [vmem:[#allocation3 + $0x23c] sm:$0xf]
        %v1944 = vunpack.c.l.b16 %v1912
        %v1945 = vunpack.c.l.b16 %v1913
        %v1946 = vunpack.c.l.b16 %v1914
        %v1947 = vunpack.c.l.b16 %v1915
        %v1948 = vunpack.c.l.b16 %v1916
        %v1949 = vunpack.c.l.b16 %v1917
        %v1950 = vunpack.c.l.b16 %v1918
        %v1951 = vunpack.c.l.b16 %v1919
        %v1952 = vpack.c.b16 %v1945, %v1944
        %v1953 = vpack.c.b16 %v1947, %v1946
        %v1954 = vpack.c.b16 %v1949, %v1948
        %v1955 = vpack.c.b16 %v1951, %v1950
        %v1976 = vunpack.c.l.b16 %v1920
        %v1977 = vunpack.c.l.b16 %v1921
        %v1978 = vunpack.c.l.b16 %v1922
        %v1979 = vunpack.c.l.b16 %v1923
        %v1980 = vunpack.c.l.b16 %v1924
        %v1981 = vunpack.c.l.b16 %v1925
        %v1982 = vunpack.c.l.b16 %v1926
        %v1983 = vunpack.c.l.b16 %v1927
        %v1984 = vunpack.c.l.b16 %v1928
        %v1985 = vunpack.c.l.b16 %v1929
        %v1986 = vunpack.c.l.b16 %v1930
        %v1987 = vunpack.c.l.b16 %v1931
        %v1988 = vunpack.c.l.b16 %v1932
        %v1989 = vunpack.c.l.b16 %v1933
        %v1990 = vunpack.c.l.b16 %v1934
        %v1991 = vunpack.c.l.b16 %v1935
        %v1992 = vpack.c.b16 %v1977, %v1976
        %v1993 = vpack.c.b16 %v1979, %v1978
        %v1994 = vpack.c.b16 %v1981, %v1980
        %v1995 = vpack.c.b16 %v1983, %v1982
        %v1996 = vpack.c.b16 %v1985, %v1984
        %v1997 = vpack.c.b16 %v1987, %v1986
        %v1998 = vpack.c.b16 %v1989, %v1988
        %v1999 = vpack.c.b16 %v1991, %v1990
        %2008 = vmatprep.subr.bf16.mxu0 0
        %2009 = vmatpush1.bf16.msra.mxu0 %v1999
        %2010 = vmatprep.subr.bf16.mxu0 0
        %2011 = vmatpush1.bf16.msra.mxu0 %v1998
        %2012 = vmatprep.subr.bf16.mxu0 0
        %2013 = vmatpush1.bf16.msra.mxu0 %v1997
        %2014 = vmatprep.subr.bf16.mxu0 0
        %2015 = vmatpush1.bf16.msra.mxu0 %v1996
        %2016 = vmatprep.subr.bf16.mxu0 0
        %2017 = vmatpush1.bf16.msra.mxu0 %v1995
        %2018 = vmatprep.subr.bf16.mxu0 0
        %2019 = vmatpush1.bf16.msra.mxu0 %v1994
        %2020 = vmatprep.subr.bf16.mxu0 0
        %2021 = vmatpush1.bf16.msra.mxu0 %v1993
        %2022 = vmatprep.subr.bf16.mxu0 0
        %2023 = vmatpush1.bf16.msra.mxu0 %v1992
        %2024 = vmatprep.subr.bf16.mxu0 0
        %2025 = vmatpush2.bf16.msra.mxu0 0
        %2026 = vmatprep.subr.bf16.mxu0 0
        %2027 = vmatpush2.bf16.msra.mxu0 0
        %2028 = vmatprep.subr.bf16.mxu0 0
        %2029 = vmatpush2.bf16.msra.mxu0 0
        %2030 = vmatprep.subr.bf16.mxu0 0
        %2031 = vmatpush2.bf16.msra.mxu0 0
        %2032 = vmatprep.subr.bf16.mxu0 0
        %2033 = vmatpush2.bf16.msra.mxu0 0
        %2034 = vmatprep.subr.bf16.mxu0 0
        %2035 = vmatpush2.bf16.msra.mxu0 0
        %2036 = vmatprep.subr.bf16.mxu0 0
        %2037 = vmatpush2.bf16.msra.mxu0 0
        %2038 = vmatprep.subr.bf16.mxu0 0
        %2039 = vmatpush2.bf16.msra.mxu0 0
        %2040 = vmatprep.mubr.bf16.mxu0 0
        %2041 = vmatmul.mubr.bf16.gmra.mxu0 %v1952
        %v2042 = vpop.f32.mrf.mxu0
        %v2043 = vadd.f32 0.0, %v2042
        %v2044 = vpop.f32.mrf.mxu0
        %v2045 = vpop.f32.mrf.mxu0
        %v2046 = vadd.f32 0.0, %v2045
        %v2047 = vpop.f32.mrf.mxu0
        %2048 = vmatprep.mubr.bf16.mxu0 0
        %2049 = vmatmul.mubr.bf16.gmra.mxu0 %v1953
        %v2050 = vpop.f32.mrf.mxu0
        %v2051 = vadd.f32 0.0, %v2050
        %v2052 = vpop.f32.mrf.mxu0
        %v2053 = vpop.f32.mrf.mxu0
        %v2054 = vadd.f32 0.0, %v2053
        %v2055 = vpop.f32.mrf.mxu0
        %2056 = vmatprep.mubr.bf16.mxu0 0
        %2057 = vmatmul.mubr.bf16.gmra.mxu0 %v1954
        %v2058 = vpop.f32.mrf.mxu0
        %v2059 = vadd.f32 0.0, %v2058
        %v2060 = vpop.f32.mrf.mxu0
        %v2061 = vpop.f32.mrf.mxu0
        %v2062 = vadd.f32 0.0, %v2061
        %v2063 = vpop.f32.mrf.mxu0
        %2064 = vmatprep.mubr.bf16.mxu0 0
        %2065 = vmatmul.mubr.bf16.gmra.mxu0 %v1955
        %v2066 = vpop.f32.mrf.mxu0
        %v2067 = vadd.f32 0.0, %v2066
        %v2068 = vpop.f32.mrf.mxu0
        %v2069 = vpop.f32.mrf.mxu0
        %v2070 = vadd.f32 0.0, %v2069
        %v2071 = vpop.f32.mrf.mxu0
        %2072 = vdwg.mxu0
        %v2073 = vadd.f32 %v1896, %v2043
        %v2074 = vadd.f32 %v1897, %v2046
        %v2075 = vadd.f32 %v1898, %v2051
        %v2076 = vadd.f32 %v1899, %v2054
        %v2077 = vadd.f32 %v1900, %v2059
        %v2078 = vadd.f32 %v1901, %v2062
        %v2079 = vadd.f32 %v1902, %v2067
        %v2080 = vadd.f32 %v1903, %v2070
        %v2081 = vld [vmem:[%s4] sm:$0x1]
        %v2083 = vlaneseq
        %v2084 = vshrl.u32 %v2083, 7
        %v2085 = vsub.s32 0, %v2084
        %v2086 = vrot.slane %v2081, %v2085
        %v2088 = vadd.f32 %v2073, %v2086
        %v2089 = vadd.f32 %v2074, %v2086
        %v2090 = vadd.f32 %v2075, %v2086
        %v2091 = vadd.f32 %v2076, %v2086
        %v2092 = vadd.f32 %v2077, %v2086
        %v2093 = vadd.f32 %v2078, %v2086
        %v2094 = vadd.f32 %v2079, %v2086
        %v2095 = vadd.f32 %v2080, %v2086
        %v2096 = vmax.f32 %v2088, 0.0
        %v2097 = vmax.f32 %v2089, 0.0
        %v2098 = vmax.f32 %v2090, 0.0
        %v2099 = vmax.f32 %v2091, 0.0
        %v2100 = vmax.f32 %v2092, 0.0
        %v2101 = vmax.f32 %v2093, 0.0
        %v2102 = vmax.f32 %v2094, 0.0
        %v2103 = vmax.f32 %v2095, 0.0
        %v2104 = vpack.c.bf16 %v2097, %v2096
        %v2105 = vpack.c.bf16 %v2099, %v2098
        %v2106 = vpack.c.bf16 %v2101, %v2100
        %v2107 = vpack.c.bf16 %v2103, %v2102
        %v2108 = vld [vmem:[%s5] sm:$0xf]
        %v2109 = vld [vmem:[%s5 + $0x4] sm:$0xf]
        %v2110 = vld [vmem:[%s5 + $0x8] sm:$0xf]
        %v2111 = vld [vmem:[%s5 + $0xc] sm:$0xf]
        %v2112 = vld [vmem:[%s5 + $0x10] sm:$0xf]
        %v2113 = vld [vmem:[%s5 + $0x14] sm:$0xf]
        %v2114 = vld [vmem:[%s5 + $0x18] sm:$0xf]
        %v2115 = vld [vmem:[%s5 + $0x1c] sm:$0xf]
        %v2116 = vld [vmem:[%s5 + $0x20] sm:$0xf]
        %v2117 = vld [vmem:[%s5 + $0x24] sm:$0xf]
        %v2118 = vld [vmem:[%s5 + $0x28] sm:$0xf]
        %v2119 = vld [vmem:[%s5 + $0x2c] sm:$0xf]
        %v2120 = vld [vmem:[%s5 + $0x30] sm:$0xf]
        %v2121 = vld [vmem:[%s5 + $0x34] sm:$0xf]
        %v2122 = vld [vmem:[%s5 + $0x38] sm:$0xf]
        %v2123 = vld [vmem:[%s5 + $0x3c] sm:$0xf]
        %v2124 = vld [vmem:[%s6] sm:$0x1]
        %v2126 = vlaneseq
        %v2127 = vshrl.u32 %v2126, 7
        %v2128 = vsub.s32 0, %v2127
        %v2129 = vrot.slane %v2124, %v2128
        %v2147 = vunpack.c.l.b16 %v2108
        %v2148 = vunpack.c.l.b16 %v2109
        %v2149 = vunpack.c.l.b16 %v2110
        %v2150 = vunpack.c.l.b16 %v2111
        %v2151 = vunpack.c.l.b16 %v2112
        %v2152 = vunpack.c.l.b16 %v2113
        %v2153 = vunpack.c.l.b16 %v2114
        %v2154 = vunpack.c.l.b16 %v2115
        %v2155 = vunpack.c.l.b16 %v2116
        %v2156 = vunpack.c.l.b16 %v2117
        %v2157 = vunpack.c.l.b16 %v2118
        %v2158 = vunpack.c.l.b16 %v2119
        %v2159 = vunpack.c.l.b16 %v2120
        %v2160 = vunpack.c.l.b16 %v2121
        %v2161 = vunpack.c.l.b16 %v2122
        %v2162 = vunpack.c.l.b16 %v2123
        %v2163 = vpack.c.b16 %v2148, %v2147
        %v2164 = vpack.c.b16 %v2150, %v2149
        %v2165 = vpack.c.b16 %v2152, %v2151
        %v2166 = vpack.c.b16 %v2154, %v2153
        %v2167 = vpack.c.b16 %v2156, %v2155
        %v2168 = vpack.c.b16 %v2158, %v2157
        %v2169 = vpack.c.b16 %v2160, %v2159
        %v2170 = vpack.c.b16 %v2162, %v2161
        %2179 = vmatprep.subr.bf16.mxu0 0
        %2180 = vmatpush1.bf16.msra.mxu0 %v2170
        %2181 = vmatprep.subr.bf16.mxu0 0
        %2182 = vmatpush1.bf16.msra.mxu0 %v2169
        %2183 = vmatprep.subr.bf16.mxu0 0
        %2184 = vmatpush1.bf16.msra.mxu0 %v2168
        %2185 = vmatprep.subr.bf16.mxu0 0
        %2186 = vmatpush1.bf16.msra.mxu0 %v2167
        %2187 = vmatprep.subr.bf16.mxu0 0
        %2188 = vmatpush1.bf16.msra.mxu0 %v2166
        %2189 = vmatprep.subr.bf16.mxu0 0
        %2190 = vmatpush1.bf16.msra.mxu0 %v2165
        %2191 = vmatprep.subr.bf16.mxu0 0
        %2192 = vmatpush1.bf16.msra.mxu0 %v2164
        %2193 = vmatprep.subr.bf16.mxu0 0
        %2194 = vmatpush1.bf16.msra.mxu0 %v2163
        %2195 = vmatprep.subr.bf16.mxu0 0
        %2196 = vmatpush2.bf16.msra.mxu0 0
        %2197 = vmatprep.subr.bf16.mxu0 0
        %2198 = vmatpush2.bf16.msra.mxu0 0
        %2199 = vmatprep.subr.bf16.mxu0 0
        %2200 = vmatpush2.bf16.msra.mxu0 0
        %2201 = vmatprep.subr.bf16.mxu0 0
        %2202 = vmatpush2.bf16.msra.mxu0 0
        %2203 = vmatprep.subr.bf16.mxu0 0
        %2204 = vmatpush2.bf16.msra.mxu0 0
        %2205 = vmatprep.subr.bf16.mxu0 0
        %2206 = vmatpush2.bf16.msra.mxu0 0
        %2207 = vmatprep.subr.bf16.mxu0 0
        %2208 = vmatpush2.bf16.msra.mxu0 0
        %2209 = vmatprep.subr.bf16.mxu0 0
        %2210 = vmatpush2.bf16.msra.mxu0 0
        %2211 = vmatprep.mubr.bf16.mxu0 0
        %2212 = vmatmul.mubr.bf16.gmra.mxu0 %v2104
        %v2213 = vpop.f32.mrf.mxu0
        %v2214 = vadd.f32 %v2129, %v2213
        %v2215 = vpop.f32.mrf.mxu0
        %v2216 = vpop.f32.mrf.mxu0
        %v2217 = vadd.f32 %v2129, %v2216
        %v2218 = vpop.f32.mrf.mxu0
        %2219 = vmatprep.mubr.bf16.mxu0 0
        %2220 = vmatmul.mubr.bf16.gmra.mxu0 %v2105
        %v2221 = vpop.f32.mrf.mxu0
        %v2222 = vadd.f32 %v2129, %v2221
        %v2223 = vpop.f32.mrf.mxu0
        %v2224 = vpop.f32.mrf.mxu0
        %v2225 = vadd.f32 %v2129, %v2224
        %v2226 = vpop.f32.mrf.mxu0
        %2227 = vmatprep.mubr.bf16.mxu0 0
        %2228 = vmatmul.mubr.bf16.gmra.mxu0 %v2106
        %v2229 = vpop.f32.mrf.mxu0
        %v2230 = vadd.f32 %v2129, %v2229
        %v2231 = vpop.f32.mrf.mxu0
        %v2232 = vpop.f32.mrf.mxu0
        %v2233 = vadd.f32 %v2129, %v2232
        %v2234 = vpop.f32.mrf.mxu0
        %2235 = vmatprep.mubr.bf16.mxu0 0
        %2236 = vmatmul.mubr.bf16.gmra.mxu0 %v2107
        %v2237 = vpop.f32.mrf.mxu0
        %v2238 = vadd.f32 %v2129, %v2237
        %v2239 = vpop.f32.mrf.mxu0
        %v2240 = vpop.f32.mrf.mxu0
        %v2241 = vadd.f32 %v2129, %v2240
        %v2242 = vpop.f32.mrf.mxu0
        %2243 = vdwg.mxu0
        %v2244 = vunpack.c.l.bf16 %v298
        %v2245 = vunpack.c.l.bf16 %v299
        %v2246 = vunpack.c.l.bf16 %v300
        %v2247 = vunpack.c.l.bf16 %v301
        %v2248 = vunpack.c.l.bf16 %v302
        %v2249 = vunpack.c.l.bf16 %v303
        %v2250 = vunpack.c.l.bf16 %v304
        %v2251 = vunpack.c.l.bf16 %v305
        %v2252 = vadd.f32 %v2214, %v2244
        %v2253 = vadd.f32 %v2217, %v2245
        %v2254 = vadd.f32 %v2222, %v2246
        %v2255 = vadd.f32 %v2225, %v2247
        %v2256 = vadd.f32 %v2230, %v2248
        %v2257 = vadd.f32 %v2233, %v2249
        %v2258 = vadd.f32 %v2238, %v2250
        %v2259 = vadd.f32 %v2241, %v2251
        %v2260 = vmax.f32 %v2252, 0.0
        %v2261 = vmax.f32 %v2253, 0.0
        %v2262 = vmax.f32 %v2254, 0.0
        %v2263 = vmax.f32 %v2255, 0.0
        %v2264 = vmax.f32 %v2256, 0.0
        %v2265 = vmax.f32 %v2257, 0.0
        %v2266 = vmax.f32 %v2258, 0.0
        %v2267 = vmax.f32 %v2259, 0.0
        %2268 = vst [vmem:[%s295] sm:$0xff] %v2260
        %2269 = vst [vmem:[%s295 + $0x8] sm:$0xff] %v2261
        %2270 = vst [vmem:[%s295 + $0x10] sm:$0xff] %v2262
        %2271 = vst [vmem:[%s295 + $0x18] sm:$0xff] %v2263
        %2272 = vst [vmem:[%s295 + $0x20] sm:$0xff] %v2264
        %2273 = vst [vmem:[%s295 + $0x28] sm:$0xff] %v2265
        %2274 = vst [vmem:[%s295 + $0x30] sm:$0xff] %v2266
        %2275 = vst [vmem:[%s295 + $0x38] sm:$0xff] %v2267
        %s2276 = smul.u32 8, %s19
        %p2277 = scmp.lt.s32.totalorder %s2276, 15
        %s2278 = scalar_select %p2277, %s2276, 15
        %s2279 = smul.addr %s2278, 8
        %s2280 = scalar_lea.vmem %s7, %s2279
        // Predicated region
        $region53: #{_lambda_.1} parent=47 // pred_check
          %p2281 = pneg %p189
        $region54: #{_lambda_.1} parent=47 // pred_check_branch
          %2283 = sbr.rel (%p2281) target = $region56
        $region55: #{_lambda_.1} parent=47 // pred_region
          %s2284 = smul.u32 8, %s19
        $region56: #{_lambda_.1} parent=47 // pred_fallthru
          _
      $region48: #{_lambda_.1} parent=5 // pred_fallthru
        _
      %p2285 = scmp.le.s32.totalorder 2, %s14
      // Predicated region
      $region57: #{_lambda_.1} parent=5 // pred_check
        %p2286 = pneg %p2285
      $region58: #{_lambda_.1} parent=5 // pred_check_branch
        %2288 = sbr.rel (%p2286) target = $region60
      $region59: #{_lambda_.1} parent=5 // pred_region
        %s2289 = ssub.s32 %s14, 2
        // Predicated region
        $region61: #{_lambda_.1} parent=59 // pred_check
          %p2290 = pneg %p195
        $region62: #{_lambda_.1} parent=59 // pred_check_branch
          %2292 = sbr.rel (%p2290) target = $region64
        $region63: #{_lambda_.1} parent=59 // pred_region
          %s2293 = smul.u32 8, %s20
          %p2294 = scmp.lt.s32.totalorder %s2293, 15
          %s2295 = scalar_select %p2294, %s2293, 15
          %s2296 = smul.addr %s2295, 8
          %s2297 = scalar_lea.vmem %s7, %s2296
        $region64: #{_lambda_.1} parent=59 // pred_fallthru
          _
      $region60: #{_lambda_.1} parent=5 // pred_fallthru
        _
    $region6: #{_lambda_.1} parent=1 // loop_footer
      %s18 = sadd.s32 1, %s14
    $region7: #{_lambda_.1} parent=1 // loop_footer_branch
      %13 = sbr.rel target = $region3
    $region8: #{_lambda_.1} parent=1 // loop_exit
      _
    %2298 = vsyncpa [#allocation4], 1
    %s2299 = scalar_lea.sflag [#allocation4], 1
    %2300 = vsyncpa %s2299, 1

</llo_original>
